<compile_context>
chip_gen: v7x
topology: tpu7x:2x2x1
jax: 0.10.0
libtpu: 0.0.40
codegen_flags: <defaults>
</compile_context>

<pallas_src>
import functools
import math

import jax
import jax.numpy as jnp
from jax.experimental import pallas as pl
from jax.experimental.pallas import tpu as pltpu


# ----------------------------- Pallas kernel -----------------------------

def _fused_kernel(x_ref, w1_ref, c1_ref, w2_ref, c2_ref, thr_ref,
                  spk_ref, z1_ref, z2_ref, *,
                  K, H, W, alpha, src1, src2, n_spikes):
    """Whole ConvSTAL forward for all batches in one invocation (grid=())."""
    N = x_ref.shape[1]                      # B * H * W  (lane axis)
    P = K // 2
    assert (W & (W - 1)) == 0 and (H & (H - 1)) == 0, "H, W must be powers of 2"
    log_w = W.bit_length() - 1

    # Spatial coordinates of every lane (flat index f = b*H*W + h*W + w).
    lane = jax.lax.broadcasted_iota(jnp.int32, (1, N), 1)
    w_idx = lane & (W - 1)
    h_idx = (lane >> log_w) & (H - 1)

    taps = [(kh - P, kw - P) for kh in range(K) for kw in range(K)]
    masks = [(w_idx + dw >= 0) & (w_idx + dw < W) &
             (h_idx + dh >= 0) & (h_idx + dh < H) for dh, dw in taps]

    def im2col(a):
        # (C, N) -> (K*K*C, N), tap-major: row (kh*K+kw)*C + c holds channel c
        # shifted by (dh, dw) with zeros at the image border ('same' padding).
        # The border mask also zeroes any roll wrap-around across batch
        # boundaries, so folding B into the lane axis is safe.
        cols = []
        for (dh, dw), m in zip(taps, masks):
            if dh == 0 and dw == 0:
                cols.append(a)
                continue
            delta = dh * W + dw                       # want out[f] = a[f+delta]
            shifted = pltpu.roll(a, shift=(-delta) % N, axis=1)
            cols.append(jnp.where(m, shifted, 0.0))
        return jnp.concatenate(cols, axis=0)

    def match(a, idx):
        # ChannelInterpolate / RepeatLayer == static row selection (sublanes);
        # inputs are already >= 0, so no extra ReLU is needed.
        return jnp.concatenate([a[i:i + 1, :] for i in idx], axis=0)

    x = x_ref[...]                                               # (C_in, N)

    # Z1: conv (+ folded BatchNorm) + ReLU, then channel matching.
    y1 = jnp.maximum(
        jnp.dot(w1_ref[...], im2col(x), preferred_element_type=jnp.float32)
        + c1_ref[...], 0.0)                                      # (l1, N)
    z1_ref[...] = match(y1, src1)                                # (C_in, N)

    # Z2: conv (+ folded BatchNorm) + ReLU, then channel matching.
    y2 = jnp.maximum(
        jnp.dot(w2_ref[...], im2col(y1), preferred_element_type=jnp.float32)
        + c2_ref[...], 0.0)                                      # (l2, N)
    z2_ref[...] = match(y2, src2)                                # (C_in, N)

    # Spike encoding: sigmoid(alpha * (y2 - thr)) for every threshold set.
    y2_rep = jnp.concatenate([y2] * n_spikes, axis=0)            # (S*l2, N)
    v = alpha * (y2_rep - thr_ref[...])
    spk_ref[...] = pl.reciprocal(1.0 + jnp.exp(-v), approx=True)


# ------------------------------- wrappers -------------------------------

def make_match_indices(out_channels, input_channels):
    """Static source-channel indices so that match(y) == y[idx, :]."""
    if out_channels == input_channels:
        return tuple(range(input_channels))
    if out_channels > input_channels:
        # ChannelInterpolateLayer: F.interpolate(mode='nearest') on channels.
        return tuple((i * out_channels) // input_channels
                     for i in range(input_channels))
    # RepeatLayer: x.repeat_interleave(input_channels // out_channels, dim=1).
    rep = input_channels // out_channels
    return tuple(i // rep for i in range(input_channels))


@functools.partial(jax.jit,
                   static_argnames=("kernel_size", "alpha", "src1", "src2"))
def conv_stal_forward(x, w1, c1, w2, c2, thr, *,
                      kernel_size, alpha, src1, src2):
    B, C_in, H, W = x.shape
    HW = H * W
    N = B * HW
    S, l2 = thr.shape[0], thr.shape[1]

    # Activations as (C, B*H*W): batch folded into the lane / matmul-N axis.
    x_flat = jnp.transpose(x, (1, 0, 2, 3)).reshape(C_in, N)
    thr_flat = jnp.tile(thr.reshape(S * l2, HW), (1, B))          # (S*l2, N)

    kernel = functools.partial(
        _fused_kernel, K=kernel_size, H=H, W=W, alpha=alpha,
        src1=src1, src2=src2, n_spikes=S)

    # Single grid step, all operands (< 0.3 MiB) whole-array in VMEM.
    # Note: on v7x (2 TensorCores) a 2-wide "parallel" grid over B would use
    # both cores; at this size the single step is strictly better on the
    # single-core v5e/v6e, so we keep the fully fused form.
    spk, z1, z2 = pl.pallas_call(
        kernel,
        out_shape=(jax.ShapeDtypeStruct((S * l2, N), jnp.float32),
                   jax.ShapeDtypeStruct((len(src1), N), jnp.float32),
                   jax.ShapeDtypeStruct((len(src2), N), jnp.float32)),
    )(x_flat, w1, c1, w2, c2, thr_flat)

    spikes = spk.reshape(S, l2, B, H, W).transpose(2, 0, 1, 3, 4)
    z1 = z1.reshape(C_in, B, H, W).transpose(1, 0, 2, 3)
    z2 = z2.reshape(C_in, B, H, W).transpose(1, 0, 2, 3)
    return spikes, z1, z2


# --------------------------------- main ----------------------------------

if __name__ == "__main__":
    B = 2
    in_channels = 4
    img_size = 16
    kernel_size = 3
    n_spikes = 3
    l1_sz = 8          # > in_channels -> Z1.match = ChannelInterpolateLayer
    l2_sz = 2          # < in_channels -> Z2.match = RepeatLayer (4 % 2 == 0)
    alpha = 25.0
    eps = 1e-5

    key = jax.random.PRNGKey(0)
    ks = jax.random.split(key, 16)

    def u(k, shape, lo, hi):
        return jax.random.uniform(k, shape, jnp.float32, lo, hi)

    # Conv params (PyTorch-default-style uniform bounds), deterministic.
    bnd1 = 1.0 / math.sqrt(in_channels * kernel_size * kernel_size)
    w1 = u(ks[0], (l1_sz, in_channels, kernel_size, kernel_size), -bnd1, bnd1)
    b1 = u(ks[1], (l1_sz,), -bnd1, bnd1)
    bnd2 = 1.0 / math.sqrt(l1_sz * kernel_size * kernel_size)
    w2 = u(ks[2], (l2_sz, l1_sz, kernel_size, kernel_size), -bnd2, bnd2)
    b2 = u(ks[3], (l2_sz,), -bnd2, bnd2)

    # BatchNorm (eval mode) affine params + running stats.
    g1, be1 = u(ks[4], (l1_sz,), 0.5, 1.5), u(ks[5], (l1_sz,), -0.1, 0.1)
    mu1, var1 = u(ks[6], (l1_sz,), -0.1, 0.1), u(ks[7], (l1_sz,), 0.5, 1.5)
    g2, be2 = u(ks[8], (l2_sz,), 0.5, 1.5), u(ks[9], (l2_sz,), -0.1, 0.1)
    mu2, var2 = u(ks[10], (l2_sz,), -0.1, 0.1), u(ks[11], (l2_sz,), 0.5, 1.5)
    s1 = g1 / jnp.sqrt(var1 + eps)
    t1 = be1 - mu1 * s1
    s2 = g2 / jnp.sqrt(var2 + eps)
    t2 = be2 - mu2 * s2

    # threshold_adder ~ U(0.4, 0.6) (already inside the clamp range)
    thr = u(ks[12], (n_spikes, l2_sz, img_size, img_size), 0.4, 0.6)
    # TODO(synk): the in-place threshold_adder.clamp_(0.001, 1.0) under
    # torch.no_grad is a training-time parameter side effect; it does not
    # change this forward's outputs, so it is skipped.

    # Fold BatchNorm(eval) into conv weights/bias and reorder the weights
    # tap-major to match the in-kernel im2col row layout:
    #   column (kh*K + kw)*C_in + c  <-  w[o, c, kh, kw].
    w1_mat = jnp.transpose(w1, (0, 2, 3, 1)).reshape(l1_sz, -1) * s1[:, None]
    c1 = (b1 * s1 + t1).reshape(l1_sz, 1)
    w2_mat = jnp.transpose(w2, (0, 2, 3, 1)).reshape(l2_sz, -1) * s2[:, None]
    c2 = (b2 * s2 + t2).reshape(l2_sz, 1)

    src1 = make_match_indices(l1_sz, in_channels)   # (0, 2, 4, 6)
    src2 = make_match_indices(l2_sz, in_channels)   # (0, 0, 1, 1)  RepeatLayer

    x = jax.random.normal(ks[13], (B, in_channels, img_size, img_size),
                          jnp.float32)

    spikes, z1, z2 = conv_stal_forward(
        x, w1_mat, c1, w2_mat, c2, thr,
        kernel_size=kernel_size, alpha=alpha, src1=src1, src2=src2)
    jax.block_until_ready((spikes, z1, z2))

    assert spikes.shape == (B, n_spikes, l2_sz, img_size, img_size)
    assert z1.shape == (B, in_channels, img_size, img_size)
    assert z2.shape == (B, in_channels, img_size, img_size)
    assert bool(jnp.all(jnp.isfinite(spikes)))
    assert bool(jnp.all(jnp.isfinite(z1))) and bool(jnp.all(jnp.isfinite(z2)))
    print("KERNEL_OK")
</pallas_src>

<mosaic_0001>
module attributes {stable_mosaic.version = 11 : i64} {
  func.func @_fused_kernel(%arg0: memref<4x512xf32, #tpu.memory_space<vmem>>, %arg1: memref<8x36xf32, #tpu.memory_space<vmem>>, %arg2: memref<8x1xf32, #tpu.memory_space<vmem>>, %arg3: memref<2x72xf32, #tpu.memory_space<vmem>>, %arg4: memref<2x1xf32, #tpu.memory_space<vmem>>, %arg5: memref<6x512xf32, #tpu.memory_space<vmem>>, %arg6: memref<6x512xf32, #tpu.memory_space<vmem>>, %arg7: memref<4x512xf32, #tpu.memory_space<vmem>>, %arg8: memref<4x512xf32, #tpu.memory_space<vmem>>) attributes {dimension_semantics = [], scalar_prefetch = 0 : i64, scratch_operands = 0 : i64, tpu.core_type = #tpu.core_type<tc>} {
    %0 = tpu.iota {dimensions = array<i32: 1>} : vector<1x512xi32>
    %c15_i32 = arith.constant 15 : i32
    %1 = vector.broadcast %c15_i32 : i32 to vector<1x512xi32>
    %2 = arith.andi %0, %1 : vector<1x512xi32>
    %c4_i32 = arith.constant 4 : i32
    %3 = vector.broadcast %c4_i32 : i32 to vector<1x512xi32>
    %4 = arith.shrsi %0, %3 : vector<1x512xi32>
    %c15_i32_0 = arith.constant 15 : i32
    %5 = vector.broadcast %c15_i32_0 : i32 to vector<1x512xi32>
    %6 = arith.andi %4, %5 : vector<1x512xi32>
    %c-1_i32 = arith.constant -1 : i32
    %7 = vector.broadcast %c-1_i32 : i32 to vector<1x512xi32>
    %8 = arith.addi %2, %7 : vector<1x512xi32>
    %c0_i32 = arith.constant 0 : i32
    %9 = vector.broadcast %c0_i32 : i32 to vector<1x512xi32>
    %10 = arith.cmpi sge, %8, %9 : vector<1x512xi32>
    %c-1_i32_1 = arith.constant -1 : i32
    %11 = vector.broadcast %c-1_i32_1 : i32 to vector<1x512xi32>
    %12 = arith.addi %2, %11 : vector<1x512xi32>
    %c16_i32 = arith.constant 16 : i32
    %13 = vector.broadcast %c16_i32 : i32 to vector<1x512xi32>
    %14 = arith.cmpi slt, %12, %13 : vector<1x512xi32>
    %15 = arith.andi %10, %14 : vector<1x512xi1>
    %c-1_i32_2 = arith.constant -1 : i32
    %16 = vector.broadcast %c-1_i32_2 : i32 to vector<1x512xi32>
    %17 = arith.addi %6, %16 : vector<1x512xi32>
    %c0_i32_3 = arith.constant 0 : i32
    %18 = vector.broadcast %c0_i32_3 : i32 to vector<1x512xi32>
    %19 = arith.cmpi sge, %17, %18 : vector<1x512xi32>
    %20 = arith.andi %15, %19 : vector<1x512xi1>
    %c-1_i32_4 = arith.constant -1 : i32
    %21 = vector.broadcast %c-1_i32_4 : i32 to vector<1x512xi32>
    %22 = arith.addi %6, %21 : vector<1x512xi32>
    %c16_i32_5 = arith.constant 16 : i32
    %23 = vector.broadcast %c16_i32_5 : i32 to vector<1x512xi32>
    %24 = arith.cmpi slt, %22, %23 : vector<1x512xi32>
    %25 = arith.andi %20, %24 : vector<1x512xi1>
    %c0_i32_6 = arith.constant 0 : i32
    %26 = vector.broadcast %c0_i32_6 : i32 to vector<1x512xi32>
    %27 = arith.addi %2, %26 : vector<1x512xi32>
    %c0_i32_7 = arith.constant 0 : i32
    %28 = vector.broadcast %c0_i32_7 : i32 to vector<1x512xi32>
    %29 = arith.cmpi sge, %27, %28 : vector<1x512xi32>
    %c0_i32_8 = arith.constant 0 : i32
    %30 = vector.broadcast %c0_i32_8 : i32 to vector<1x512xi32>
    %31 = arith.addi %2, %30 : vector<1x512xi32>
    %c16_i32_9 = arith.constant 16 : i32
    %32 = vector.broadcast %c16_i32_9 : i32 to vector<1x512xi32>
    %33 = arith.cmpi slt, %31, %32 : vector<1x512xi32>
    %34 = arith.andi %29, %33 : vector<1x512xi1>
    %c-1_i32_10 = arith.constant -1 : i32
    %35 = vector.broadcast %c-1_i32_10 : i32 to vector<1x512xi32>
    %36 = arith.addi %6, %35 : vector<1x512xi32>
    %c0_i32_11 = arith.constant 0 : i32
    %37 = vector.broadcast %c0_i32_11 : i32 to vector<1x512xi32>
    %38 = arith.cmpi sge, %36, %37 : vector<1x512xi32>
    %39 = arith.andi %34, %38 : vector<1x512xi1>
    %c-1_i32_12 = arith.constant -1 : i32
    %40 = vector.broadcast %c-1_i32_12 : i32 to vector<1x512xi32>
    %41 = arith.addi %6, %40 : vector<1x512xi32>
    %c16_i32_13 = arith.constant 16 : i32
    %42 = vector.broadcast %c16_i32_13 : i32 to vector<1x512xi32>
    %43 = arith.cmpi slt, %41, %42 : vector<1x512xi32>
    %44 = arith.andi %39, %43 : vector<1x512xi1>
    %c1_i32 = arith.constant 1 : i32
    %45 = vector.broadcast %c1_i32 : i32 to vector<1x512xi32>
    %46 = arith.addi %2, %45 : vector<1x512xi32>
    %c0_i32_14 = arith.constant 0 : i32
    %47 = vector.broadcast %c0_i32_14 : i32 to vector<1x512xi32>
    %48 = arith.cmpi sge, %46, %47 : vector<1x512xi32>
    %c1_i32_15 = arith.constant 1 : i32
    %49 = vector.broadcast %c1_i32_15 : i32 to vector<1x512xi32>
    %50 = arith.addi %2, %49 : vector<1x512xi32>
    %c16_i32_16 = arith.constant 16 : i32
    %51 = vector.broadcast %c16_i32_16 : i32 to vector<1x512xi32>
    %52 = arith.cmpi slt, %50, %51 : vector<1x512xi32>
    %53 = arith.andi %48, %52 : vector<1x512xi1>
    %c-1_i32_17 = arith.constant -1 : i32
    %54 = vector.broadcast %c-1_i32_17 : i32 to vector<1x512xi32>
    %55 = arith.addi %6, %54 : vector<1x512xi32>
    %c0_i32_18 = arith.constant 0 : i32
    %56 = vector.broadcast %c0_i32_18 : i32 to vector<1x512xi32>
    %57 = arith.cmpi sge, %55, %56 : vector<1x512xi32>
    %58 = arith.andi %53, %57 : vector<1x512xi1>
    %c-1_i32_19 = arith.constant -1 : i32
    %59 = vector.broadcast %c-1_i32_19 : i32 to vector<1x512xi32>
    %60 = arith.addi %6, %59 : vector<1x512xi32>
    %c16_i32_20 = arith.constant 16 : i32
    %61 = vector.broadcast %c16_i32_20 : i32 to vector<1x512xi32>
    %62 = arith.cmpi slt, %60, %61 : vector<1x512xi32>
    %63 = arith.andi %58, %62 : vector<1x512xi1>
    %c-1_i32_21 = arith.constant -1 : i32
    %64 = vector.broadcast %c-1_i32_21 : i32 to vector<1x512xi32>
    %65 = arith.addi %2, %64 : vector<1x512xi32>
    %c0_i32_22 = arith.constant 0 : i32
    %66 = vector.broadcast %c0_i32_22 : i32 to vector<1x512xi32>
    %67 = arith.cmpi sge, %65, %66 : vector<1x512xi32>
    %c-1_i32_23 = arith.constant -1 : i32
    %68 = vector.broadcast %c-1_i32_23 : i32 to vector<1x512xi32>
    %69 = arith.addi %2, %68 : vector<1x512xi32>
    %c16_i32_24 = arith.constant 16 : i32
    %70 = vector.broadcast %c16_i32_24 : i32 to vector<1x512xi32>
    %71 = arith.cmpi slt, %69, %70 : vector<1x512xi32>
    %72 = arith.andi %67, %71 : vector<1x512xi1>
    %c0_i32_25 = arith.constant 0 : i32
    %73 = vector.broadcast %c0_i32_25 : i32 to vector<1x512xi32>
    %74 = arith.addi %6, %73 : vector<1x512xi32>
    %c0_i32_26 = arith.constant 0 : i32
    %75 = vector.broadcast %c0_i32_26 : i32 to vector<1x512xi32>
    %76 = arith.cmpi sge, %74, %75 : vector<1x512xi32>
    %77 = arith.andi %72, %76 : vector<1x512xi1>
    %c0_i32_27 = arith.constant 0 : i32
    %78 = vector.broadcast %c0_i32_27 : i32 to vector<1x512xi32>
    %79 = arith.addi %6, %78 : vector<1x512xi32>
    %c16_i32_28 = arith.constant 16 : i32
    %80 = vector.broadcast %c16_i32_28 : i32 to vector<1x512xi32>
    %81 = arith.cmpi slt, %79, %80 : vector<1x512xi32>
    %82 = arith.andi %77, %81 : vector<1x512xi1>
    %c1_i32_29 = arith.constant 1 : i32
    %83 = vector.broadcast %c1_i32_29 : i32 to vector<1x512xi32>
    %84 = arith.addi %2, %83 : vector<1x512xi32>
    %c0_i32_30 = arith.constant 0 : i32
    %85 = vector.broadcast %c0_i32_30 : i32 to vector<1x512xi32>
    %86 = arith.cmpi sge, %84, %85 : vector<1x512xi32>
    %c1_i32_31 = arith.constant 1 : i32
    %87 = vector.broadcast %c1_i32_31 : i32 to vector<1x512xi32>
    %88 = arith.addi %2, %87 : vector<1x512xi32>
    %c16_i32_32 = arith.constant 16 : i32
    %89 = vector.broadcast %c16_i32_32 : i32 to vector<1x512xi32>
    %90 = arith.cmpi slt, %88, %89 : vector<1x512xi32>
    %91 = arith.andi %86, %90 : vector<1x512xi1>
    %c0_i32_33 = arith.constant 0 : i32
    %92 = vector.broadcast %c0_i32_33 : i32 to vector<1x512xi32>
    %93 = arith.addi %6, %92 : vector<1x512xi32>
    %c0_i32_34 = arith.constant 0 : i32
    %94 = vector.broadcast %c0_i32_34 : i32 to vector<1x512xi32>
    %95 = arith.cmpi sge, %93, %94 : vector<1x512xi32>
    %96 = arith.andi %91, %95 : vector<1x512xi1>
    %c0_i32_35 = arith.constant 0 : i32
    %97 = vector.broadcast %c0_i32_35 : i32 to vector<1x512xi32>
    %98 = arith.addi %6, %97 : vector<1x512xi32>
    %c16_i32_36 = arith.constant 16 : i32
    %99 = vector.broadcast %c16_i32_36 : i32 to vector<1x512xi32>
    %100 = arith.cmpi slt, %98, %99 : vector<1x512xi32>
    %101 = arith.andi %96, %100 : vector<1x512xi1>
    %c-1_i32_37 = arith.constant -1 : i32
    %102 = vector.broadcast %c-1_i32_37 : i32 to vector<1x512xi32>
    %103 = arith.addi %2, %102 : vector<1x512xi32>
    %c0_i32_38 = arith.constant 0 : i32
    %104 = vector.broadcast %c0_i32_38 : i32 to vector<1x512xi32>
    %105 = arith.cmpi sge, %103, %104 : vector<1x512xi32>
    %c-1_i32_39 = arith.constant -1 : i32
    %106 = vector.broadcast %c-1_i32_39 : i32 to vector<1x512xi32>
    %107 = arith.addi %2, %106 : vector<1x512xi32>
    %c16_i32_40 = arith.constant 16 : i32
    %108 = vector.broadcast %c16_i32_40 : i32 to vector<1x512xi32>
    %109 = arith.cmpi slt, %107, %108 : vector<1x512xi32>
    %110 = arith.andi %105, %109 : vector<1x512xi1>
    %c1_i32_41 = arith.constant 1 : i32
    %111 = vector.broadcast %c1_i32_41 : i32 to vector<1x512xi32>
    %112 = arith.addi %6, %111 : vector<1x512xi32>
    %c0_i32_42 = arith.constant 0 : i32
    %113 = vector.broadcast %c0_i32_42 : i32 to vector<1x512xi32>
    %114 = arith.cmpi sge, %112, %113 : vector<1x512xi32>
    %115 = arith.andi %110, %114 : vector<1x512xi1>
    %c1_i32_43 = arith.constant 1 : i32
    %116 = vector.broadcast %c1_i32_43 : i32 to vector<1x512xi32>
    %117 = arith.addi %6, %116 : vector<1x512xi32>
    %c16_i32_44 = arith.constant 16 : i32
    %118 = vector.broadcast %c16_i32_44 : i32 to vector<1x512xi32>
    %119 = arith.cmpi slt, %117, %118 : vector<1x512xi32>
    %120 = arith.andi %115, %119 : vector<1x512xi1>
    %c0_i32_45 = arith.constant 0 : i32
    %121 = vector.broadcast %c0_i32_45 : i32 to vector<1x512xi32>
    %122 = arith.addi %2, %121 : vector<1x512xi32>
    %c0_i32_46 = arith.constant 0 : i32
    %123 = vector.broadcast %c0_i32_46 : i32 to vector<1x512xi32>
    %124 = arith.cmpi sge, %122, %123 : vector<1x512xi32>
    %c0_i32_47 = arith.constant 0 : i32
    %125 = vector.broadcast %c0_i32_47 : i32 to vector<1x512xi32>
    %126 = arith.addi %2, %125 : vector<1x512xi32>
    %c16_i32_48 = arith.constant 16 : i32
    %127 = vector.broadcast %c16_i32_48 : i32 to vector<1x512xi32>
    %128 = arith.cmpi slt, %126, %127 : vector<1x512xi32>
    %129 = arith.andi %124, %128 : vector<1x512xi1>
    %c1_i32_49 = arith.constant 1 : i32
    %130 = vector.broadcast %c1_i32_49 : i32 to vector<1x512xi32>
    %131 = arith.addi %6, %130 : vector<1x512xi32>
    %c0_i32_50 = arith.constant 0 : i32
    %132 = vector.broadcast %c0_i32_50 : i32 to vector<1x512xi32>
    %133 = arith.cmpi sge, %131, %132 : vector<1x512xi32>
    %134 = arith.andi %129, %133 : vector<1x512xi1>
    %c1_i32_51 = arith.constant 1 : i32
    %135 = vector.broadcast %c1_i32_51 : i32 to vector<1x512xi32>
    %136 = arith.addi %6, %135 : vector<1x512xi32>
    %c16_i32_52 = arith.constant 16 : i32
    %137 = vector.broadcast %c16_i32_52 : i32 to vector<1x512xi32>
    %138 = arith.cmpi slt, %136, %137 : vector<1x512xi32>
    %139 = arith.andi %134, %138 : vector<1x512xi1>
    %c1_i32_53 = arith.constant 1 : i32
    %140 = vector.broadcast %c1_i32_53 : i32 to vector<1x512xi32>
    %141 = arith.addi %2, %140 : vector<1x512xi32>
    %c0_i32_54 = arith.constant 0 : i32
    %142 = vector.broadcast %c0_i32_54 : i32 to vector<1x512xi32>
    %143 = arith.cmpi sge, %141, %142 : vector<1x512xi32>
    %c1_i32_55 = arith.constant 1 : i32
    %144 = vector.broadcast %c1_i32_55 : i32 to vector<1x512xi32>
    %145 = arith.addi %2, %144 : vector<1x512xi32>
    %c16_i32_56 = arith.constant 16 : i32
    %146 = vector.broadcast %c16_i32_56 : i32 to vector<1x512xi32>
    %147 = arith.cmpi slt, %145, %146 : vector<1x512xi32>
    %148 = arith.andi %143, %147 : vector<1x512xi1>
    %c1_i32_57 = arith.constant 1 : i32
    %149 = vector.broadcast %c1_i32_57 : i32 to vector<1x512xi32>
    %150 = arith.addi %6, %149 : vector<1x512xi32>
    %c0_i32_58 = arith.constant 0 : i32
    %151 = vector.broadcast %c0_i32_58 : i32 to vector<1x512xi32>
    %152 = arith.cmpi sge, %150, %151 : vector<1x512xi32>
    %153 = arith.andi %148, %152 : vector<1x512xi1>
    %c1_i32_59 = arith.constant 1 : i32
    %154 = vector.broadcast %c1_i32_59 : i32 to vector<1x512xi32>
    %155 = arith.addi %6, %154 : vector<1x512xi32>
    %c16_i32_60 = arith.constant 16 : i32
    %156 = vector.broadcast %c16_i32_60 : i32 to vector<1x512xi32>
    %157 = arith.cmpi slt, %155, %156 : vector<1x512xi32>
    %158 = arith.andi %153, %157 : vector<1x512xi1>
    %c0 = arith.constant 0 : index
    %c0_61 = arith.constant 0 : index
    %159 = vector.load %arg0[%c0, %c0_61] : memref<4x512xf32, #tpu.memory_space<vmem>>, vector<4x512xf32>
    %c0_62 = arith.constant 0 : index
    %c0_63 = arith.constant 0 : index
    %160 = vector.load %arg1[%c0_62, %c0_63] : memref<8x36xf32, #tpu.memory_space<vmem>>, vector<8x36xf32>
    %c17_i32 = arith.constant 17 : i32
    %161 = tpu.dynamic_rotate %159 by %c17_i32 dim 1 : vector<4x512xf32>, i32 -> vector<4x512xf32>
    %cst = arith.constant 0.000000e+00 : f32
    %162 = vector.shape_cast %25 : vector<1x512xi1> to vector<1x512xi1>
    %163 = vector.broadcast %162 : vector<1x512xi1> to vector<4x512xi1>
    %164 = vector.broadcast %cst : f32 to vector<4x512xf32>
    %165 = arith.select %163, %161, %164 : vector<4x512xi1>, vector<4x512xf32>
    %c16_i32_64 = arith.constant 16 : i32
    %166 = tpu.dynamic_rotate %159 by %c16_i32_64 dim 1 : vector<4x512xf32>, i32 -> vector<4x512xf32>
    %cst_65 = arith.constant 0.000000e+00 : f32
    %167 = vector.shape_cast %44 : vector<1x512xi1> to vector<1x512xi1>
    %168 = vector.broadcast %167 : vector<1x512xi1> to vector<4x512xi1>
    %169 = vector.broadcast %cst_65 : f32 to vector<4x512xf32>
    %170 = arith.select %168, %166, %169 : vector<4x512xi1>, vector<4x512xf32>
    %c15_i32_66 = arith.constant 15 : i32
    %171 = tpu.dynamic_rotate %159 by %c15_i32_66 dim 1 : vector<4x512xf32>, i32 -> vector<4x512xf32>
    %cst_67 = arith.constant 0.000000e+00 : f32
    %172 = vector.shape_cast %63 : vector<1x512xi1> to vector<1x512xi1>
    %173 = vector.broadcast %172 : vector<1x512xi1> to vector<4x512xi1>
    %174 = vector.broadcast %cst_67 : f32 to vector<4x512xf32>
    %175 = arith.select %173, %171, %174 : vector<4x512xi1>, vector<4x512xf32>
    %c1_i32_68 = arith.constant 1 : i32
    %176 = tpu.dynamic_rotate %159 by %c1_i32_68 dim 1 : vector<4x512xf32>, i32 -> vector<4x512xf32>
    %cst_69 = arith.constant 0.000000e+00 : f32
    %177 = vector.shape_cast %82 : vector<1x512xi1> to vector<1x512xi1>
    %178 = vector.broadcast %177 : vector<1x512xi1> to vector<4x512xi1>
    %179 = vector.broadcast %cst_69 : f32 to vector<4x512xf32>
    %180 = arith.select %178, %176, %179 : vector<4x512xi1>, vector<4x512xf32>
    %c511_i32 = arith.constant 511 : i32
    %181 = tpu.dynamic_rotate %159 by %c511_i32 dim 1 : vector<4x512xf32>, i32 -> vector<4x512xf32>
    %cst_70 = arith.constant 0.000000e+00 : f32
    %182 = vector.shape_cast %101 : vector<1x512xi1> to vector<1x512xi1>
    %183 = vector.broadcast %182 : vector<1x512xi1> to vector<4x512xi1>
    %184 = vector.broadcast %cst_70 : f32 to vector<4x512xf32>
    %185 = arith.select %183, %181, %184 : vector<4x512xi1>, vector<4x512xf32>
    %c497_i32 = arith.constant 497 : i32
    %186 = tpu.dynamic_rotate %159 by %c497_i32 dim 1 : vector<4x512xf32>, i32 -> vector<4x512xf32>
    %cst_71 = arith.constant 0.000000e+00 : f32
    %187 = vector.shape_cast %120 : vector<1x512xi1> to vector<1x512xi1>
    %188 = vector.broadcast %187 : vector<1x512xi1> to vector<4x512xi1>
    %189 = vector.broadcast %cst_71 : f32 to vector<4x512xf32>
    %190 = arith.select %188, %186, %189 : vector<4x512xi1>, vector<4x512xf32>
    %c496_i32 = arith.constant 496 : i32
    %191 = tpu.dynamic_rotate %159 by %c496_i32 dim 1 : vector<4x512xf32>, i32 -> vector<4x512xf32>
    %cst_72 = arith.constant 0.000000e+00 : f32
    %192 = vector.shape_cast %139 : vector<1x512xi1> to vector<1x512xi1>
    %193 = vector.broadcast %192 : vector<1x512xi1> to vector<4x512xi1>
    %194 = vector.broadcast %cst_72 : f32 to vector<4x512xf32>
    %195 = arith.select %193, %191, %194 : vector<4x512xi1>, vector<4x512xf32>
    %c495_i32 = arith.constant 495 : i32
    %196 = tpu.dynamic_rotate %159 by %c495_i32 dim 1 : vector<4x512xf32>, i32 -> vector<4x512xf32>
    %cst_73 = arith.constant 0.000000e+00 : f32
    %197 = vector.shape_cast %158 : vector<1x512xi1> to vector<1x512xi1>
    %198 = vector.broadcast %197 : vector<1x512xi1> to vector<4x512xi1>
    %199 = vector.broadcast %cst_73 : f32 to vector<4x512xf32>
    %200 = arith.select %198, %196, %199 : vector<4x512xi1>, vector<4x512xf32>
    %201 = tpu.concatenate %165, %170, %175, %180, %159, %185, %190, %195, %200 in 0 : vector<4x512xf32>, vector<4x512xf32>, vector<4x512xf32>, vector<4x512xf32>, vector<4x512xf32>, vector<4x512xf32>, vector<4x512xf32>, vector<4x512xf32>, vector<4x512xf32> -> vector<36x512xf32>
    %cst_74 = arith.constant dense<0.000000e+00> : vector<8x512xf32>
    %202 = tpu.matmul %160, %201, %cst_74 {dimension_numbers = #tpu.dot_dimension_numbers<[1], [0], [0], [1], [0, 0, 1, 1], [], []>} : vector<8x36xf32>, vector<36x512xf32>, vector<8x512xf32> -> vector<8x512xf32>
    %c0_75 = arith.constant 0 : index
    %c0_76 = arith.constant 0 : index
    %203 = vector.load %arg2[%c0_75, %c0_76] : memref<8x1xf32, #tpu.memory_space<vmem>>, vector<8x1xf32>
    %204 = vector.broadcast %203 : vector<8x1xf32> to vector<8x512xf32>
    %205 = arith.addf %202, %204 : vector<8x512xf32>
    %cst_77 = arith.constant 0.000000e+00 : f32
    %206 = vector.broadcast %cst_77 : f32 to vector<8x512xf32>
    %207 = arith.maximumf %205, %206 : vector<8x512xf32>
    %208 = vector.extract_strided_slice %207 {offsets = [0, 0], sizes = [1, 512], strides = [1, 1]} : vector<8x512xf32> to vector<1x512xf32>
    %209 = vector.extract_strided_slice %207 {offsets = [2, 0], sizes = [1, 512], strides = [1, 1]} : vector<8x512xf32> to vector<1x512xf32>
    %210 = vector.extract_strided_slice %207 {offsets = [4, 0], sizes = [1, 512], strides = [1, 1]} : vector<8x512xf32> to vector<1x512xf32>
    %211 = vector.extract_strided_slice %207 {offsets = [6, 0], sizes = [1, 512], strides = [1, 1]} : vector<8x512xf32> to vector<1x512xf32>
    %212 = tpu.concatenate %208, %209, %210, %211 in 0 : vector<1x512xf32>, vector<1x512xf32>, vector<1x512xf32>, vector<1x512xf32> -> vector<4x512xf32>
    %c0_78 = arith.constant 0 : index
    %c0_79 = arith.constant 0 : index
    %213 = vector.load %arg7[%c0_78, %c0_79] : memref<4x512xf32, #tpu.memory_space<vmem>>, vector<4x512xf32>
    tpu.vector_store %arg7[%c0_78, %c0_79], %212 {strides = array<i32>} : memref<4x512xf32, #tpu.memory_space<vmem>>, vector<4x512xf32>,
    %c0_80 = arith.constant 0 : index
    %c0_81 = arith.constant 0 : index
    %214 = vector.load %arg3[%c0_80, %c0_81] : memref<2x72xf32, #tpu.memory_space<vmem>>, vector<2x72xf32>
    %c17_i32_82 = arith.constant 17 : i32
    %215 = tpu.dynamic_rotate %207 by %c17_i32_82 dim 1 : vector<8x512xf32>, i32 -> vector<8x512xf32>
    %cst_83 = arith.constant 0.000000e+00 : f32
    %216 = vector.shape_cast %25 : vector<1x512xi1> to vector<1x512xi1>
    %217 = vector.broadcast %216 : vector<1x512xi1> to vector<8x512xi1>
    %218 = vector.broadcast %cst_83 : f32 to vector<8x512xf32>
    %219 = arith.select %217, %215, %218 : vector<8x512xi1>, vector<8x512xf32>
    %c16_i32_84 = arith.constant 16 : i32
    %220 = tpu.dynamic_rotate %207 by %c16_i32_84 dim 1 : vector<8x512xf32>, i32 -> vector<8x512xf32>
    %cst_85 = arith.constant 0.000000e+00 : f32
    %221 = vector.shape_cast %44 : vector<1x512xi1> to vector<1x512xi1>
    %222 = vector.broadcast %221 : vector<1x512xi1> to vector<8x512xi1>
    %223 = vector.broadcast %cst_85 : f32 to vector<8x512xf32>
    %224 = arith.select %222, %220, %223 : vector<8x512xi1>, vector<8x512xf32>
    %c15_i32_86 = arith.constant 15 : i32
    %225 = tpu.dynamic_rotate %207 by %c15_i32_86 dim 1 : vector<8x512xf32>, i32 -> vector<8x512xf32>
    %cst_87 = arith.constant 0.000000e+00 : f32
    %226 = vector.shape_cast %63 : vector<1x512xi1> to vector<1x512xi1>
    %227 = vector.broadcast %226 : vector<1x512xi1> to vector<8x512xi1>
    %228 = vector.broadcast %cst_87 : f32 to vector<8x512xf32>
    %229 = arith.select %227, %225, %228 : vector<8x512xi1>, vector<8x512xf32>
    %c1_i32_88 = arith.constant 1 : i32
    %230 = tpu.dynamic_rotate %207 by %c1_i32_88 dim 1 : vector<8x512xf32>, i32 -> vector<8x512xf32>
    %cst_89 = arith.constant 0.000000e+00 : f32
    %231 = vector.shape_cast %82 : vector<1x512xi1> to vector<1x512xi1>
    %232 = vector.broadcast %231 : vector<1x512xi1> to vector<8x512xi1>
    %233 = vector.broadcast %cst_89 : f32 to vector<8x512xf32>
    %234 = arith.select %232, %230, %233 : vector<8x512xi1>, vector<8x512xf32>
    %c511_i32_90 = arith.constant 511 : i32
    %235 = tpu.dynamic_rotate %207 by %c511_i32_90 dim 1 : vector<8x512xf32>, i32 -> vector<8x512xf32>
    %cst_91 = arith.constant 0.000000e+00 : f32
    %236 = vector.shape_cast %101 : vector<1x512xi1> to vector<1x512xi1>
    %237 = vector.broadcast %236 : vector<1x512xi1> to vector<8x512xi1>
    %238 = vector.broadcast %cst_91 : f32 to vector<8x512xf32>
    %239 = arith.select %237, %235, %238 : vector<8x512xi1>, vector<8x512xf32>
    %c497_i32_92 = arith.constant 497 : i32
    %240 = tpu.dynamic_rotate %207 by %c497_i32_92 dim 1 : vector<8x512xf32>, i32 -> vector<8x512xf32>
    %cst_93 = arith.constant 0.000000e+00 : f32
    %241 = vector.shape_cast %120 : vector<1x512xi1> to vector<1x512xi1>
    %242 = vector.broadcast %241 : vector<1x512xi1> to vector<8x512xi1>
    %243 = vector.broadcast %cst_93 : f32 to vector<8x512xf32>
    %244 = arith.select %242, %240, %243 : vector<8x512xi1>, vector<8x512xf32>
    %c496_i32_94 = arith.constant 496 : i32
    %245 = tpu.dynamic_rotate %207 by %c496_i32_94 dim 1 : vector<8x512xf32>, i32 -> vector<8x512xf32>
    %cst_95 = arith.constant 0.000000e+00 : f32
    %246 = vector.shape_cast %139 : vector<1x512xi1> to vector<1x512xi1>
    %247 = vector.broadcast %246 : vector<1x512xi1> to vector<8x512xi1>
    %248 = vector.broadcast %cst_95 : f32 to vector<8x512xf32>
    %249 = arith.select %247, %245, %248 : vector<8x512xi1>, vector<8x512xf32>
    %c495_i32_96 = arith.constant 495 : i32
    %250 = tpu.dynamic_rotate %207 by %c495_i32_96 dim 1 : vector<8x512xf32>, i32 -> vector<8x512xf32>
    %cst_97 = arith.constant 0.000000e+00 : f32
    %251 = vector.shape_cast %158 : vector<1x512xi1> to vector<1x512xi1>
    %252 = vector.broadcast %251 : vector<1x512xi1> to vector<8x512xi1>
    %253 = vector.broadcast %cst_97 : f32 to vector<8x512xf32>
    %254 = arith.select %252, %250, %253 : vector<8x512xi1>, vector<8x512xf32>
    %255 = tpu.concatenate %219, %224, %229, %234, %207, %239, %244, %249, %254 in 0 : vector<8x512xf32>, vector<8x512xf32>, vector<8x512xf32>, vector<8x512xf32>, vector<8x512xf32>, vector<8x512xf32>, vector<8x512xf32>, vector<8x512xf32>, vector<8x512xf32> -> vector<72x512xf32>
    %cst_98 = arith.constant dense<0.000000e+00> : vector<2x512xf32>
    %256 = tpu.matmul %214, %255, %cst_98 {dimension_numbers = #tpu.dot_dimension_numbers<[1], [0], [0], [1], [0, 0, 1, 1], [], []>} : vector<2x72xf32>, vector<72x512xf32>, vector<2x512xf32> -> vector<2x512xf32>
    %c0_99 = arith.constant 0 : index
    %c0_100 = arith.constant 0 : index
    %257 = vector.load %arg4[%c0_99, %c0_100] : memref<2x1xf32, #tpu.memory_space<vmem>>, vector<2x1xf32>
    %258 = vector.broadcast %257 : vector<2x1xf32> to vector<2x512xf32>
    %259 = arith.addf %256, %258 : vector<2x512xf32>
    %cst_101 = arith.constant 0.000000e+00 : f32
    %260 = vector.broadcast %cst_101 : f32 to vector<2x512xf32>
    %261 = arith.maximumf %259, %260 : vector<2x512xf32>
    %262 = vector.extract_strided_slice %261 {offsets = [0, 0], sizes = [1, 512], strides = [1, 1]} : vector<2x512xf32> to vector<1x512xf32>
    %263 = vector.extract_strided_slice %261 {offsets = [0, 0], sizes = [1, 512], strides = [1, 1]} : vector<2x512xf32> to vector<1x512xf32>
    %264 = vector.extract_strided_slice %261 {offsets = [1, 0], sizes = [1, 512], strides = [1, 1]} : vector<2x512xf32> to vector<1x512xf32>
    %265 = vector.extract_strided_slice %261 {offsets = [1, 0], sizes = [1, 512], strides = [1, 1]} : vector<2x512xf32> to vector<1x512xf32>
    %266 = tpu.concatenate %262, %263, %264, %265 in 0 : vector<1x512xf32>, vector<1x512xf32>, vector<1x512xf32>, vector<1x512xf32> -> vector<4x512xf32>
    %c0_102 = arith.constant 0 : index
    %c0_103 = arith.constant 0 : index
    %267 = vector.load %arg8[%c0_102, %c0_103] : memref<4x512xf32, #tpu.memory_space<vmem>>, vector<4x512xf32>
    tpu.vector_store %arg8[%c0_102, %c0_103], %266 {strides = array<i32>} : memref<4x512xf32, #tpu.memory_space<vmem>>, vector<4x512xf32>,
    %268 = tpu.concatenate %261, %261, %261 in 0 : vector<2x512xf32>, vector<2x512xf32>, vector<2x512xf32> -> vector<6x512xf32>
    %c0_104 = arith.constant 0 : index
    %c0_105 = arith.constant 0 : index
    %269 = vector.load %arg5[%c0_104, %c0_105] : memref<6x512xf32, #tpu.memory_space<vmem>>, vector<6x512xf32>
    %270 = arith.subf %268, %269 : vector<6x512xf32>
    %cst_106 = arith.constant 2.500000e+01 : f32
    %271 = vector.broadcast %cst_106 : f32 to vector<6x512xf32>
    %272 = arith.mulf %271, %270 : vector<6x512xf32>
    %cst_107 = arith.constant 0.000000e+00 : f32
    %273 = vector.broadcast %cst_107 : f32 to vector<6x512xf32>
    %274 = arith.subf %273, %272 : vector<6x512xf32>
    %275 = math.exp %274 : vector<6x512xf32>
    %cst_108 = arith.constant 1.000000e+00 : f32
    %276 = vector.broadcast %cst_108 : f32 to vector<6x512xf32>
    %277 = arith.addf %276, %275 : vector<6x512xf32>
    %278 = tpu.reciprocal %277 {approx = true} : vector<6x512xf32> -> vector<6x512xf32>
    %c0_109 = arith.constant 0 : index
    %c0_110 = arith.constant 0 : index
    %279 = vector.load %arg6[%c0_109, %c0_110] : memref<6x512xf32, #tpu.memory_space<vmem>>, vector<6x512xf32>
    tpu.vector_store %arg6[%c0_109, %c0_110], %278 {strides = array<i32>} : memref<6x512xf32, #tpu.memory_space<vmem>>, vector<6x512xf32>,
    return
  }
}

</mosaic_0001>

<llo_original>
// kernel: conv_stal_forward.1
$region0: #{conv_stal_forward.1}
  #allocation0 [shape = 'u32[]', space=smem, size = 0x4, offset = 0x4, fixed_abs, tag = 'smem constant byte address 0x4 - core index']
  #allocation1 [shape = 'u32[144,128]{1,0:T(1,128)}', space=vmem, size = 0x12000, scoped, tag = 'internal scratch']
  %s0 = inlined_call_operand.vmem [shape: f32[4,512], index: 0, kind: input, shape index: {}]
  %s1 = inlined_call_operand.vmem [shape: f32[8,36], index: 1, kind: input, shape index: {}]
  %s2 = inlined_call_operand.vmem [shape: f32[8,1], index: 2, kind: input, shape index: {}]
  %s3 = inlined_call_operand.vmem [shape: f32[2,72], index: 3, kind: input, shape index: {}]
  %s4 = inlined_call_operand.vmem [shape: f32[2,1], index: 4, kind: input, shape index: {}]
  %s5 = inlined_call_operand.vmem [shape: f32[6,512], index: 5, kind: input, shape index: {}]
  %s6 = inlined_call_operand.vmem [shape: f32[6,512], index: 6, kind: output, shape index: {0}]
  %s7 = inlined_call_operand.vmem [shape: f32[4,512], index: 7, kind: output, shape index: {1}]
  %s8 = inlined_call_operand.vmem [shape: f32[4,512], index: 8, kind: output, shape index: {2}]
  %9 = xla_tuple %s6, %s7, %s8
  %s10 = sld [smem:[#allocation0]]
  $region50: #{conv_stal_forward.1} parent=0
    _
  %s12 = ssub.s32 1, %s10
  %s13 = scalar_select 0, %s12, %s10
  // Predicated region
  $region2: #{conv_stal_forward.1} parent=0 // pred_check
    _
  $region3: #{conv_stal_forward.1} parent=0 // pred_check_branch
    %15 = sbr.rel (0) target = $region5
  $region4: #{conv_stal_forward.1} parent=0 // pred_region
    _
  $region5: #{conv_stal_forward.1} parent=0 // pred_fallthru
    _
  // Predicated region
  $region6: #{conv_stal_forward.1} parent=0 // pred_check
    _
  $region7: #{conv_stal_forward.1} parent=0 // pred_check_branch
    %17 = sbr.rel (0) target = $region9
  $region8: #{conv_stal_forward.1} parent=0 // pred_region
    _
  $region9: #{conv_stal_forward.1} parent=0 // pred_fallthru
    _
  // Predicated region
  $region10: #{conv_stal_forward.1} parent=0 // pred_check
    _
  $region11: #{conv_stal_forward.1} parent=0 // pred_check_branch
    %19 = sbr.rel (0) target = $region13
  $region12: #{conv_stal_forward.1} parent=0 // pred_region
    _
  $region13: #{conv_stal_forward.1} parent=0 // pred_fallthru
    _
  // Predicated region
  $region14: #{conv_stal_forward.1} parent=0 // pred_check
    _
  $region15: #{conv_stal_forward.1} parent=0 // pred_check_branch
    %21 = sbr.rel (0) target = $region17
  $region16: #{conv_stal_forward.1} parent=0 // pred_region
    _
  $region17: #{conv_stal_forward.1} parent=0 // pred_fallthru
    _
  // Predicated region
  $region18: #{conv_stal_forward.1} parent=0 // pred_check
    _
  $region19: #{conv_stal_forward.1} parent=0 // pred_check_branch
    %23 = sbr.rel (0) target = $region21
  $region20: #{conv_stal_forward.1} parent=0 // pred_region
    _
  $region21: #{conv_stal_forward.1} parent=0 // pred_fallthru
    _
  // Predicated region
  $region22: #{conv_stal_forward.1} parent=0 // pred_check
    _
  $region23: #{conv_stal_forward.1} parent=0 // pred_check_branch
    %25 = sbr.rel (0) target = $region25
  $region24: #{conv_stal_forward.1} parent=0 // pred_region
    _
  $region25: #{conv_stal_forward.1} parent=0 // pred_fallthru
    _
  %v26 = vlaneseq
  %v27 = vand.u32 %v26, 127
  %v28 = vadd.s32 %v27, 128
  %v29 = vadd.s32 %v27, 256
  %v30 = vadd.s32 %v27, 384
  %v31 = vand.u32 %v27, 15
  %v32 = vand.u32 %v28, 15
  %v33 = vand.u32 %v29, 15
  %v34 = vand.u32 %v30, 15
  %v35 = vshra.s32 %v27, 4
  %v36 = vshra.s32 %v28, 4
  %v37 = vshra.s32 %v29, 4
  %v38 = vshra.s32 %v30, 4
  %v39 = vand.u32 %v35, 15
  %v40 = vand.u32 %v36, 15
  %v41 = vand.u32 %v37, 15
  %v42 = vand.u32 %v38, 15
  %v43 = vadd.s32 %v31, 4294967295
  %v44 = vadd.s32 %v32, 4294967295
  %v45 = vadd.s32 %v33, 4294967295
  %v46 = vadd.s32 %v34, 4294967295
  %vm47 = vcmp.ge.s32.totalorder %v43, 0
  %vm48 = vcmp.ge.s32.totalorder %v44, 0
  %vm49 = vcmp.ge.s32.totalorder %v45, 0
  %vm50 = vcmp.ge.s32.totalorder %v46, 0
  %vm51 = vcmp.lt.s32.totalorder %v43, 16
  %vm52 = vcmp.lt.s32.totalorder %v44, 16
  %vm53 = vcmp.lt.s32.totalorder %v45, 16
  %vm54 = vcmp.lt.s32.totalorder %v46, 16
  %vm55 = vmand %vm47, %vm51
  %vm56 = vmand %vm48, %vm52
  %vm57 = vmand %vm49, %vm53
  %vm58 = vmand %vm50, %vm54
  %v59 = vadd.s32 %v39, 4294967295
  %v60 = vadd.s32 %v40, 4294967295
  %v61 = vadd.s32 %v41, 4294967295
  %v62 = vadd.s32 %v42, 4294967295
  %vm63 = vcmp.ge.s32.totalorder %v59, 0
  %vm64 = vcmp.ge.s32.totalorder %v60, 0
  %vm65 = vcmp.ge.s32.totalorder %v61, 0
  %vm66 = vcmp.ge.s32.totalorder %v62, 0
  %vm67 = vmand %vm55, %vm63
  %vm68 = vmand %vm56, %vm64
  %vm69 = vmand %vm57, %vm65
  %vm70 = vmand %vm58, %vm66
  %vm71 = vcmp.lt.s32.totalorder %v59, 16
  %vm72 = vcmp.lt.s32.totalorder %v60, 16
  %vm73 = vcmp.lt.s32.totalorder %v61, 16
  %vm74 = vcmp.lt.s32.totalorder %v62, 16
  %vm75 = vmand %vm67, %vm71
  %vm76 = vmand %vm68, %vm72
  %vm77 = vmand %vm69, %vm73
  %vm78 = vmand %vm70, %vm74
  %vm79 = vcmp.ge.s32.totalorder %v31, 0
  %vm80 = vcmp.ge.s32.totalorder %v32, 0
  %vm81 = vcmp.ge.s32.totalorder %v33, 0
  %vm82 = vcmp.ge.s32.totalorder %v34, 0
  %vm83 = vcmp.lt.s32.totalorder %v31, 16
  %vm84 = vcmp.lt.s32.totalorder %v32, 16
  %vm85 = vcmp.lt.s32.totalorder %v33, 16
  %vm86 = vcmp.lt.s32.totalorder %v34, 16
  %vm87 = vmand %vm79, %vm83
  %vm88 = vmand %vm80, %vm84
  %vm89 = vmand %vm81, %vm85
  %vm90 = vmand %vm82, %vm86
  %vm91 = vmand %vm87, %vm63
  %vm92 = vmand %vm88, %vm64
  %vm93 = vmand %vm89, %vm65
  %vm94 = vmand %vm90, %vm66
  %vm95 = vmand %vm91, %vm71
  %vm96 = vmand %vm92, %vm72
  %vm97 = vmand %vm93, %vm73
  %vm98 = vmand %vm94, %vm74
  %v99 = vadd.s32 %v31, 1
  %v100 = vadd.s32 %v32, 1
  %v101 = vadd.s32 %v33, 1
  %v102 = vadd.s32 %v34, 1
  %vm103 = vcmp.ge.s32.totalorder %v99, 0
  %vm104 = vcmp.ge.s32.totalorder %v100, 0
  %vm105 = vcmp.ge.s32.totalorder %v101, 0
  %vm106 = vcmp.ge.s32.totalorder %v102, 0
  %vm107 = vcmp.lt.s32.totalorder %v99, 16
  %vm108 = vcmp.lt.s32.totalorder %v100, 16
  %vm109 = vcmp.lt.s32.totalorder %v101, 16
  %vm110 = vcmp.lt.s32.totalorder %v102, 16
  %vm111 = vmand %vm103, %vm107
  %vm112 = vmand %vm104, %vm108
  %vm113 = vmand %vm105, %vm109
  %vm114 = vmand %vm106, %vm110
  %vm115 = vmand %vm111, %vm63
  %vm116 = vmand %vm112, %vm64
  %vm117 = vmand %vm113, %vm65
  %vm118 = vmand %vm114, %vm66
  %vm119 = vmand %vm115, %vm71
  %vm120 = vmand %vm116, %vm72
  %vm121 = vmand %vm117, %vm73
  %vm122 = vmand %vm118, %vm74
  %vm123 = vcmp.ge.s32.totalorder %v39, 0
  %vm124 = vcmp.ge.s32.totalorder %v40, 0
  %vm125 = vcmp.ge.s32.totalorder %v41, 0
  %vm126 = vcmp.ge.s32.totalorder %v42, 0
  %vm127 = vmand %vm55, %vm123
  %vm128 = vmand %vm56, %vm124
  %vm129 = vmand %vm57, %vm125
  %vm130 = vmand %vm58, %vm126
  %vm131 = vcmp.lt.s32.totalorder %v39, 16
  %vm132 = vcmp.lt.s32.totalorder %v40, 16
  %vm133 = vcmp.lt.s32.totalorder %v41, 16
  %vm134 = vcmp.lt.s32.totalorder %v42, 16
  %vm135 = vmand %vm127, %vm131
  %vm136 = vmand %vm128, %vm132
  %vm137 = vmand %vm129, %vm133
  %vm138 = vmand %vm130, %vm134
  %vm139 = vmand %vm111, %vm123
  %vm140 = vmand %vm112, %vm124
  %vm141 = vmand %vm113, %vm125
  %vm142 = vmand %vm114, %vm126
  %vm143 = vmand %vm139, %vm131
  %vm144 = vmand %vm140, %vm132
  %vm145 = vmand %vm141, %vm133
  %vm146 = vmand %vm142, %vm134
  %v147 = vadd.s32 %v39, 1
  %v148 = vadd.s32 %v40, 1
  %v149 = vadd.s32 %v41, 1
  %v150 = vadd.s32 %v42, 1
  %vm151 = vcmp.ge.s32.totalorder %v147, 0
  %vm152 = vcmp.ge.s32.totalorder %v148, 0
  %vm153 = vcmp.ge.s32.totalorder %v149, 0
  %vm154 = vcmp.ge.s32.totalorder %v150, 0
  %vm155 = vmand %vm55, %vm151
  %vm156 = vmand %vm56, %vm152
  %vm157 = vmand %vm57, %vm153
  %vm158 = vmand %vm58, %vm154
  %vm159 = vcmp.lt.s32.totalorder %v147, 16
  %vm160 = vcmp.lt.s32.totalorder %v148, 16
  %vm161 = vcmp.lt.s32.totalorder %v149, 16
  %vm162 = vcmp.lt.s32.totalorder %v150, 16
  %vm163 = vmand %vm155, %vm159
  %vm164 = vmand %vm156, %vm160
  %vm165 = vmand %vm157, %vm161
  %vm166 = vmand %vm158, %vm162
  %vm167 = vmand %vm87, %vm151
  %vm168 = vmand %vm88, %vm152
  %vm169 = vmand %vm89, %vm153
  %vm170 = vmand %vm90, %vm154
  %vm171 = vmand %vm167, %vm159
  %vm172 = vmand %vm168, %vm160
  %vm173 = vmand %vm169, %vm161
  %vm174 = vmand %vm170, %vm162
  %vm175 = vmand %vm111, %vm151
  %vm176 = vmand %vm112, %vm152
  %vm177 = vmand %vm113, %vm153
  %vm178 = vmand %vm114, %vm154
  %vm179 = vmand %vm175, %vm159
  %vm180 = vmand %vm176, %vm160
  %vm181 = vmand %vm177, %vm161
  %vm182 = vmand %vm178, %vm162
  %v183 = vld [vmem:[%s0] sm:$0xff]
  %v184 = vld [vmem:[%s0 + $0x8] sm:$0xff]
  %v185 = vld [vmem:[%s1] sm:$0xff]
  %v188 = vcombine.high %v183, %v183
  %v189 = vcombine.high %v184, %v184
  %192 = vrot.lane.b32.xlu0 %v183, 17
  %v193 = vpop.permute.xlu0 %192
  %194 = vrot.lane.b32.xlu0 %v188, 17
  %v195 = vpop.permute.xlu0 %194
  %196 = vrot.lane.b32.xlu0 %v184, 17
  %v197 = vpop.permute.xlu0 %196
  %198 = vrot.lane.b32.xlu0 %v189, 17
  %v199 = vpop.permute.xlu0 %198
  %vm200 = vcmp.lt.s32.totalorder %v27, 17
  %v201 = vsel %vm200, %v197, %v199
  %v202 = vsel %vm200, %v195, %v197
  %v203 = vsel %vm200, %v193, %v195
  %v204 = vsel %vm200, %v199, %v193
  %v205 = vsel %vm75, 1, 0
  %v206 = vsel %vm76, 1, 0
  %v207 = vsel %vm77, 1, 0
  %v208 = vsel %vm78, 1, 0
  %vm209 = vcmp.eq.s32.totalorder %v205, 1
  %vm210 = vcmp.eq.s32.totalorder %v206, 1
  %vm211 = vcmp.eq.s32.totalorder %v207, 1
  %vm212 = vcmp.eq.s32.totalorder %v208, 1
  %v213 = vsel %vm209, %v204, 0.0
  %v214 = vsel %vm210, %v203, 0.0
  %v215 = vsel %vm211, %v202, 0.0
  %v216 = vsel %vm212, %v201, 0.0
  %217 = vrot.lane.b32.xlu0 %v183, 16
  %v218 = vpop.permute.xlu0 %217
  %219 = vrot.lane.b32.xlu0 %v188, 16
  %v220 = vpop.permute.xlu0 %219
  %221 = vrot.lane.b32.xlu0 %v184, 16
  %v222 = vpop.permute.xlu0 %221
  %223 = vrot.lane.b32.xlu0 %v189, 16
  %v224 = vpop.permute.xlu0 %223
  %vm225 = vcmp.lt.s32.totalorder %v27, 16
  %v226 = vsel %vm225, %v222, %v224
  %v227 = vsel %vm225, %v220, %v222
  %v228 = vsel %vm225, %v218, %v220
  %v229 = vsel %vm225, %v224, %v218
  %v230 = vsel %vm95, 1, 0
  %v231 = vsel %vm96, 1, 0
  %v232 = vsel %vm97, 1, 0
  %v233 = vsel %vm98, 1, 0
  %vm234 = vcmp.eq.s32.totalorder %v230, 1
  %vm235 = vcmp.eq.s32.totalorder %v231, 1
  %vm236 = vcmp.eq.s32.totalorder %v232, 1
  %vm237 = vcmp.eq.s32.totalorder %v233, 1
  %v238 = vsel %vm234, %v229, 0.0
  %v239 = vsel %vm235, %v228, 0.0
  %v240 = vsel %vm236, %v227, 0.0
  %v241 = vsel %vm237, %v226, 0.0
  %242 = vrot.lane.b32.xlu0 %v183, 15
  %v243 = vpop.permute.xlu0 %242
  %244 = vrot.lane.b32.xlu0 %v188, 15
  %v245 = vpop.permute.xlu0 %244
  %246 = vrot.lane.b32.xlu0 %v184, 15
  %v247 = vpop.permute.xlu0 %246
  %248 = vrot.lane.b32.xlu0 %v189, 15
  %v249 = vpop.permute.xlu0 %248
  %vm250 = vcmp.lt.s32.totalorder %v27, 15
  %v251 = vsel %vm250, %v247, %v249
  %v252 = vsel %vm250, %v245, %v247
  %v253 = vsel %vm250, %v243, %v245
  %v254 = vsel %vm250, %v249, %v243
  %v255 = vsel %vm119, 1, 0
  %v256 = vsel %vm120, 1, 0
  %v257 = vsel %vm121, 1, 0
  %v258 = vsel %vm122, 1, 0
  %vm259 = vcmp.eq.s32.totalorder %v255, 1
  %vm260 = vcmp.eq.s32.totalorder %v256, 1
  %vm261 = vcmp.eq.s32.totalorder %v257, 1
  %vm262 = vcmp.eq.s32.totalorder %v258, 1
  %v263 = vsel %vm259, %v254, 0.0
  %v264 = vsel %vm260, %v253, 0.0
  %v265 = vsel %vm261, %v252, 0.0
  %v266 = vsel %vm262, %v251, 0.0
  %267 = vrot.lane.b32.xlu0 %v183, 1
  %v268 = vpop.permute.xlu0 %267
  %269 = vrot.lane.b32.xlu0 %v188, 1
  %v270 = vpop.permute.xlu0 %269
  %271 = vrot.lane.b32.xlu0 %v184, 1
  %v272 = vpop.permute.xlu0 %271
  %273 = vrot.lane.b32.xlu0 %v189, 1
  %v274 = vpop.permute.xlu0 %273
  %vm275 = vcmp.lt.s32.totalorder %v27, 1
  %v276 = vsel %vm275, %v272, %v274
  %v277 = vsel %vm275, %v270, %v272
  %v278 = vsel %vm275, %v268, %v270
  %v279 = vsel %vm275, %v274, %v268
  %v280 = vsel %vm135, 1, 0
  %v281 = vsel %vm136, 1, 0
  %v282 = vsel %vm137, 1, 0
  %v283 = vsel %vm138, 1, 0
  %vm284 = vcmp.eq.s32.totalorder %v280, 1
  %vm285 = vcmp.eq.s32.totalorder %v281, 1
  %vm286 = vcmp.eq.s32.totalorder %v282, 1
  %vm287 = vcmp.eq.s32.totalorder %v283, 1
  %v288 = vsel %vm284, %v279, 0.0
  %v289 = vsel %vm285, %v278, 0.0
  %v290 = vsel %vm286, %v277, 0.0
  %v291 = vsel %vm287, %v276, 0.0
  %292 = vrot.lane.b32.xlu0 %v183, 127
  %v293 = vpop.permute.xlu0 %292
  %294 = vrot.lane.b32.xlu0 %v188, 127
  %v295 = vpop.permute.xlu0 %294
  %296 = vrot.lane.b32.xlu0 %v184, 127
  %v297 = vpop.permute.xlu0 %296
  %298 = vrot.lane.b32.xlu0 %v189, 127
  %v299 = vpop.permute.xlu0 %298
  %vm300 = vcmp.lt.s32.totalorder %v27, 127
  %v301 = vsel %vm300, %v297, %v299
  %v302 = vsel %vm300, %v295, %v297
  %v303 = vsel %vm300, %v293, %v295
  %v304 = vsel %vm300, %v299, %v293
  %v305 = vsel %vm143, 1, 0
  %v306 = vsel %vm144, 1, 0
  %v307 = vsel %vm145, 1, 0
  %v308 = vsel %vm146, 1, 0
  %vm309 = vcmp.eq.s32.totalorder %v305, 1
  %vm310 = vcmp.eq.s32.totalorder %v306, 1
  %vm311 = vcmp.eq.s32.totalorder %v307, 1
  %vm312 = vcmp.eq.s32.totalorder %v308, 1
  %v313 = vsel %vm309, %v303, 0.0
  %v314 = vsel %vm310, %v302, 0.0
  %v315 = vsel %vm311, %v301, 0.0
  %v316 = vsel %vm312, %v304, 0.0
  %317 = vrot.lane.b32.xlu0 %v183, 113
  %v318 = vpop.permute.xlu0 %317
  %319 = vrot.lane.b32.xlu0 %v188, 113
  %v320 = vpop.permute.xlu0 %319
  %321 = vrot.lane.b32.xlu0 %v184, 113
  %v322 = vpop.permute.xlu0 %321
  %323 = vrot.lane.b32.xlu0 %v189, 113
  %v324 = vpop.permute.xlu0 %323
  %vm325 = vcmp.lt.s32.totalorder %v27, 113
  %v326 = vsel %vm325, %v322, %v324
  %v327 = vsel %vm325, %v320, %v322
  %v328 = vsel %vm325, %v318, %v320
  %v329 = vsel %vm325, %v324, %v318
  %v330 = vsel %vm163, 1, 0
  %v331 = vsel %vm164, 1, 0
  %v332 = vsel %vm165, 1, 0
  %v333 = vsel %vm166, 1, 0
  %vm334 = vcmp.eq.s32.totalorder %v330, 1
  %vm335 = vcmp.eq.s32.totalorder %v331, 1
  %vm336 = vcmp.eq.s32.totalorder %v332, 1
  %vm337 = vcmp.eq.s32.totalorder %v333, 1
  %v338 = vsel %vm334, %v328, 0.0
  %v339 = vsel %vm335, %v327, 0.0
  %v340 = vsel %vm336, %v326, 0.0
  %v341 = vsel %vm337, %v329, 0.0
  %342 = vrot.lane.b32.xlu0 %v183, 112
  %v343 = vpop.permute.xlu0 %342
  %344 = vrot.lane.b32.xlu0 %v188, 112
  %v345 = vpop.permute.xlu0 %344
  %346 = vrot.lane.b32.xlu0 %v184, 112
  %v347 = vpop.permute.xlu0 %346
  %348 = vrot.lane.b32.xlu0 %v189, 112
  %v349 = vpop.permute.xlu0 %348
  %vm350 = vcmp.lt.s32.totalorder %v27, 112
  %v351 = vsel %vm350, %v347, %v349
  %v352 = vsel %vm350, %v345, %v347
  %v353 = vsel %vm350, %v343, %v345
  %v354 = vsel %vm350, %v349, %v343
  %v355 = vsel %vm171, 1, 0
  %v356 = vsel %vm172, 1, 0
  %v357 = vsel %vm173, 1, 0
  %v358 = vsel %vm174, 1, 0
  %vm359 = vcmp.eq.s32.totalorder %v355, 1
  %vm360 = vcmp.eq.s32.totalorder %v356, 1
  %vm361 = vcmp.eq.s32.totalorder %v357, 1
  %vm362 = vcmp.eq.s32.totalorder %v358, 1
  %v363 = vsel %vm359, %v353, 0.0
  %v364 = vsel %vm360, %v352, 0.0
  %v365 = vsel %vm361, %v351, 0.0
  %v366 = vsel %vm362, %v354, 0.0
  %367 = vrot.lane.b32.xlu0 %v183, 111
  %v368 = vpop.permute.xlu0 %367
  %369 = vrot.lane.b32.xlu0 %v188, 111
  %v370 = vpop.permute.xlu0 %369
  %371 = vrot.lane.b32.xlu0 %v184, 111
  %v372 = vpop.permute.xlu0 %371
  %373 = vrot.lane.b32.xlu0 %v189, 111
  %v374 = vpop.permute.xlu0 %373
  %vm375 = vcmp.lt.s32.totalorder %v27, 111
  %v376 = vsel %vm375, %v372, %v374
  %v377 = vsel %vm375, %v370, %v372
  %v378 = vsel %vm375, %v368, %v370
  %v379 = vsel %vm375, %v374, %v368
  %v380 = vsel %vm179, 1, 0
  %v381 = vsel %vm180, 1, 0
  %v382 = vsel %vm181, 1, 0
  %v383 = vsel %vm182, 1, 0
  %vm384 = vcmp.eq.s32.totalorder %v380, 1
  %vm385 = vcmp.eq.s32.totalorder %v381, 1
  %vm386 = vcmp.eq.s32.totalorder %v382, 1
  %vm387 = vcmp.eq.s32.totalorder %v383, 1
  %v388 = vsel %vm384, %v378, 0.0
  %v389 = vsel %vm385, %v377, 0.0
  %v390 = vsel %vm386, %v376, 0.0
  %v391 = vsel %vm387, %v379, 0.0
  %v396 = vrot.slane %v238, 4
  %v397 = vrot.slane %v239, 4
  %v398 = vrot.slane %v240, 4
  %v399 = vrot.slane %v241, 4
  %v408 = vrot.slane %v288, 4
  %v409 = vrot.slane %v289, 4
  %v410 = vrot.slane %v290, 4
  %v411 = vrot.slane %v291, 4
  %v420 = vrot.slane %v313, 4
  %v421 = vrot.slane %v314, 4
  %v422 = vrot.slane %v315, 4
  %v423 = vrot.slane %v316, 4
  %v432 = vrot.slane %v363, 4
  %v433 = vrot.slane %v364, 4
  %v434 = vrot.slane %v365, 4
  %v435 = vrot.slane %v366, 4
  %vm440 = vcmask 1043456
  %v441 = vsel %vm440, %v213, %v396
  %v442 = vsel %vm440, %v214, %v397
  %v443 = vsel %vm440, %v215, %v398
  %v444 = vsel %vm440, %v216, %v399
  %v445 = vsel %vm440, %v263, %v408
  %v446 = vsel %vm440, %v264, %v409
  %v447 = vsel %vm440, %v265, %v410
  %v448 = vsel %vm440, %v266, %v411
  %v449 = vsel %vm440, %v183, %v420
  %v450 = vsel %vm440, %v188, %v421
  %v451 = vsel %vm440, %v184, %v422
  %v452 = vsel %vm440, %v189, %v423
  %v453 = vsel %vm440, %v338, %v432
  %v454 = vsel %vm440, %v339, %v433
  %v455 = vsel %vm440, %v340, %v434
  %v456 = vsel %vm440, %v341, %v435
  %v457 = vld [vmem:[%s2] sm:$0xff]
  %459 = vset.pattern.permute.xlu0 0
  %460 = vperm.xlu0 %459, %v457
  %v461 = vpop.permute.xlu0 %460
  %vm463 = vcmask 293888
  %v465 = vsel %vm463, %v185, 0
  %v468 = vsel %vm440, %v388, 0
  %v471 = vsel %vm440, %v389, 0
  %v474 = vsel %vm440, %v390, 0
  %v477 = vsel %vm440, %v391, 0
  %479 = vmatprep.subr.mxu0 %v442
  %480 = vmatpush1.msra.mxu0 %v441
  %481 = vmatprep.subr.mxu0 %v446
  %482 = vmatpush1.msra.mxu0 %v445
  %483 = vmatprep.subr.mxu0 %v450
  %484 = vmatpush1.msra.mxu0 %v449
  %485 = vmatprep.subr.mxu0 %v454
  %486 = vmatpush1.msra.mxu0 %v453
  %487 = vmatprep.subr.mxu0 %v471
  %488 = vmatpush1.msra.mxu0 %v468
  %489 = vmatprep.subr.mxu0 0.0
  %490 = vmatpush1.msra.mxu0 0.0
  %491 = vmatprep.subr.mxu0 0.0
  %492 = vmatpush1.msra.mxu0 0.0
  %493 = vmatprep.subr.mxu0 0.0
  %494 = vmatpush1.msra.mxu0 0.0
  %495 = vmatprep.subr.mxu0 0.0
  %496 = vmatpush1.msra.mxu0 0.0
  %497 = vmatprep.subr.mxu0 0.0
  %498 = vmatpush1.msra.mxu0 0.0
  %499 = vmatprep.subr.mxu0 0.0
  %500 = vmatpush1.msra.mxu0 0.0
  %501 = vmatprep.subr.mxu0 0.0
  %502 = vmatpush1.msra.mxu0 0.0
  %503 = vmatprep.subr.mxu0 0.0
  %504 = vmatpush1.msra.mxu0 0.0
  %505 = vmatprep.subr.mxu0 0.0
  %506 = vmatpush1.msra.mxu0 0.0
  %507 = vmatprep.subr.mxu0 0.0
  %508 = vmatpush1.msra.mxu0 0.0
  %509 = vmatprep.subr.mxu0 0.0
  %510 = vmatpush1.msra.mxu0 0.0
  %511 = vmatprep.subr.mxu0 0.0
  %512 = vmatpush1.msra.mxu0 0.0
  %513 = vmatprep.subr.mxu0 0.0
  %514 = vmatpush1.msra.mxu0 0.0
  %515 = vmatprep.subr.mxu0 0.0
  %516 = vmatpush1.msra.mxu0 0.0
  %517 = vmatprep.subr.mxu0 0.0
  %518 = vmatpush1.msra.mxu0 0.0
  %519 = vmatprep.subr.mxu0 0.0
  %520 = vmatpush1.msra.mxu0 0.0
  %521 = vmatprep.subr.mxu0 0.0
  %522 = vmatpush1.msra.mxu0 0.0
  %523 = vmatprep.subr.mxu0 0.0
  %524 = vmatpush1.msra.mxu0 0.0
  %525 = vmatprep.subr.mxu0 0.0
  %526 = vmatpush1.msra.mxu0 0.0
  %527 = vmatprep.subr.mxu0 0.0
  %528 = vmatpush1.msra.mxu0 0.0
  %529 = vmatprep.subr.mxu0 0.0
  %530 = vmatpush1.msra.mxu0 0.0
  %531 = vmatprep.subr.mxu0 0.0
  %532 = vmatpush1.msra.mxu0 0.0
  %533 = vmatprep.subr.mxu0 0.0
  %534 = vmatpush1.msra.mxu0 0.0
  %535 = vmatprep.subr.mxu0 0.0
  %536 = vmatpush1.msra.mxu0 0.0
  %537 = vmatprep.subr.mxu0 0.0
  %538 = vmatpush1.msra.mxu0 0.0
  %539 = vmatprep.subr.mxu0 0.0
  %540 = vmatpush1.msra.mxu0 0.0
  %541 = vmatprep.subr.mxu0 0.0
  %542 = vmatpush1.msra.mxu0 0.0
  %543 = vmatprep.mubr.f32.mxu0 0.0
  %544 = vmatmul.mubr.f32.gmra.mrb[0].mxu0 %v465
  %v545 = vpop.f32.mrb[0].mxu0
  %v546 = vadd.f32 %v461, %v545
  %v547 = vpop.f32.mrb[0].mxu0
  %v548 = vadd.f32 %v461, %v547
  %549 = vdwg.mxu0
  %550 = vmatprep.subr.mxu0 %v444
  %551 = vmatpush1.msra.mxu0 %v443
  %552 = vmatprep.subr.mxu0 %v448
  %553 = vmatpush1.msra.mxu0 %v447
  %554 = vmatprep.subr.mxu0 %v452
  %555 = vmatpush1.msra.mxu0 %v451
  %556 = vmatprep.subr.mxu0 %v456
  %557 = vmatpush1.msra.mxu0 %v455
  %558 = vmatprep.subr.mxu0 %v477
  %559 = vmatpush1.msra.mxu0 %v474
  %560 = vmatprep.subr.mxu0 0.0
  %561 = vmatpush1.msra.mxu0 0.0
  %562 = vmatprep.subr.mxu0 0.0
  %563 = vmatpush1.msra.mxu0 0.0
  %564 = vmatprep.subr.mxu0 0.0
  %565 = vmatpush1.msra.mxu0 0.0
  %566 = vmatprep.subr.mxu0 0.0
  %567 = vmatpush1.msra.mxu0 0.0
  %568 = vmatprep.subr.mxu0 0.0
  %569 = vmatpush1.msra.mxu0 0.0
  %570 = vmatprep.subr.mxu0 0.0
  %571 = vmatpush1.msra.mxu0 0.0
  %572 = vmatprep.subr.mxu0 0.0
  %573 = vmatpush1.msra.mxu0 0.0
  %574 = vmatprep.subr.mxu0 0.0
  %575 = vmatpush1.msra.mxu0 0.0
  %576 = vmatprep.subr.mxu0 0.0
  %577 = vmatpush1.msra.mxu0 0.0
  %578 = vmatprep.subr.mxu0 0.0
  %579 = vmatpush1.msra.mxu0 0.0
  %580 = vmatprep.subr.mxu0 0.0
  %581 = vmatpush1.msra.mxu0 0.0
  %582 = vmatprep.subr.mxu0 0.0
  %583 = vmatpush1.msra.mxu0 0.0
  %584 = vmatprep.subr.mxu0 0.0
  %585 = vmatpush1.msra.mxu0 0.0
  %586 = vmatprep.subr.mxu0 0.0
  %587 = vmatpush1.msra.mxu0 0.0
  %588 = vmatprep.subr.mxu0 0.0
  %589 = vmatpush1.msra.mxu0 0.0
  %590 = vmatprep.subr.mxu0 0.0
  %591 = vmatpush1.msra.mxu0 0.0
  %592 = vmatprep.subr.mxu0 0.0
  %593 = vmatpush1.msra.mxu0 0.0
  %594 = vmatprep.subr.mxu0 0.0
  %595 = vmatpush1.msra.mxu0 0.0
  %596 = vmatprep.subr.mxu0 0.0
  %597 = vmatpush1.msra.mxu0 0.0
  %598 = vmatprep.subr.mxu0 0.0
  %599 = vmatpush1.msra.mxu0 0.0
  %600 = vmatprep.subr.mxu0 0.0
  %601 = vmatpush1.msra.mxu0 0.0
  %602 = vmatprep.subr.mxu0 0.0
  %603 = vmatpush1.msra.mxu0 0.0
  %604 = vmatprep.subr.mxu0 0.0
  %605 = vmatpush1.msra.mxu0 0.0
  %606 = vmatprep.subr.mxu0 0.0
  %607 = vmatpush1.msra.mxu0 0.0
  %608 = vmatprep.subr.mxu0 0.0
  %609 = vmatpush1.msra.mxu0 0.0
  %610 = vmatprep.subr.mxu0 0.0
  %611 = vmatpush1.msra.mxu0 0.0
  %612 = vmatprep.subr.mxu0 0.0
  %613 = vmatpush1.msra.mxu0 0.0
  %614 = vmatprep.mubr.f32.mxu0 0.0
  %615 = vmatmul.mubr.f32.gmra.mrb[0].mxu0 %v465
  %v616 = vpop.f32.mrb[0].mxu0
  %v617 = vadd.f32 %v461, %v616
  %v618 = vpop.f32.mrb[0].mxu0
  %v619 = vadd.f32 %v461, %v618
  %620 = vdwg.mxu0
  %v621 = vmax.f32 %v546, 0.0
  %v622 = vmax.f32 %v548, 0.0
  %v623 = vmax.f32 %v617, 0.0
  %v624 = vmax.f32 %v619, 0.0
  %v629 = vrot.slane %v621, 1
  %v630 = vrot.slane %v622, 1
  %v631 = vrot.slane %v623, 1
  %v632 = vrot.slane %v624, 1
  %v637 = vrot.slane %v621, 2
  %v638 = vrot.slane %v622, 2
  %v639 = vrot.slane %v623, 2
  %v640 = vrot.slane %v624, 2
  %v645 = vrot.slane %v621, 3
  %v646 = vrot.slane %v622, 3
  %v647 = vrot.slane %v623, 3
  %v648 = vrot.slane %v624, 3
  %vm653 = vcmask 1040384
  %v654 = vsel %vm653, %v621, %v629
  %v655 = vsel %vm653, %v622, %v630
  %v656 = vsel %vm653, %v623, %v631
  %v657 = vsel %vm653, %v624, %v632
  %vm658 = vcmask 1041408
  %v659 = vsel %vm658, %v654, %v637
  %v660 = vsel %vm658, %v655, %v638
  %v661 = vsel %vm658, %v656, %v639
  %v662 = vsel %vm658, %v657, %v640
  %vm663 = vcmask 1042432
  %v664 = vsel %vm663, %v659, %v645
  %v665 = vsel %vm663, %v660, %v646
  %v666 = vsel %vm663, %v661, %v647
  %v667 = vsel %vm663, %v662, %v648
  %v672 = vcombine.low %v664, %v665
  %v673 = vcombine.low %v666, %v667
  %676 = vst [vmem:[%s7] sm:$0xff] %v672
  %677 = vst [vmem:[%s7 + $0x8] sm:$0xff] %v673
  %v678 = vld [vmem:[%s3] sm:$0x3]
  %679 = vrot.lane.b32.xlu0 %v621, 17
  %v680 = vpop.permute.xlu0 %679
  %681 = vrot.lane.b32.xlu0 %v622, 17
  %v682 = vpop.permute.xlu0 %681
  %683 = vrot.lane.b32.xlu0 %v623, 17
  %v684 = vpop.permute.xlu0 %683
  %685 = vrot.lane.b32.xlu0 %v624, 17
  %v686 = vpop.permute.xlu0 %685
  %v687 = vsel %vm200, %v684, %v686
  %v688 = vsel %vm200, %v682, %v684
  %v689 = vsel %vm200, %v680, %v682
  %v690 = vsel %vm200, %v686, %v680
  %v691 = vsel %vm209, %v690, 0.0
  %v692 = vsel %vm210, %v689, 0.0
  %v693 = vsel %vm211, %v688, 0.0
  %v694 = vsel %vm212, %v687, 0.0
  %695 = vrot.lane.b32.xlu0 %v621, 16
  %v696 = vpop.permute.xlu0 %695
  %697 = vrot.lane.b32.xlu0 %v622, 16
  %v698 = vpop.permute.xlu0 %697
  %699 = vrot.lane.b32.xlu0 %v623, 16
  %v700 = vpop.permute.xlu0 %699
  %701 = vrot.lane.b32.xlu0 %v624, 16
  %v702 = vpop.permute.xlu0 %701
  %v703 = vsel %vm225, %v700, %v702
  %v704 = vsel %vm225, %v698, %v700
  %v705 = vsel %vm225, %v696, %v698
  %v706 = vsel %vm225, %v702, %v696
  %v707 = vsel %vm234, %v706, 0.0
  %v708 = vsel %vm235, %v705, 0.0
  %v709 = vsel %vm236, %v704, 0.0
  %v710 = vsel %vm237, %v703, 0.0
  %711 = vrot.lane.b32.xlu0 %v621, 15
  %v712 = vpop.permute.xlu0 %711
  %713 = vrot.lane.b32.xlu0 %v622, 15
  %v714 = vpop.permute.xlu0 %713
  %715 = vrot.lane.b32.xlu0 %v623, 15
  %v716 = vpop.permute.xlu0 %715
  %717 = vrot.lane.b32.xlu0 %v624, 15
  %v718 = vpop.permute.xlu0 %717
  %v719 = vsel %vm250, %v716, %v718
  %v720 = vsel %vm250, %v714, %v716
  %v721 = vsel %vm250, %v712, %v714
  %v722 = vsel %vm250, %v718, %v712
  %v723 = vsel %vm259, %v722, 0.0
  %v724 = vsel %vm260, %v721, 0.0
  %v725 = vsel %vm261, %v720, 0.0
  %v726 = vsel %vm262, %v719, 0.0
  %727 = vrot.lane.b32.xlu0 %v621, 1
  %v728 = vpop.permute.xlu0 %727
  %729 = vrot.lane.b32.xlu0 %v622, 1
  %v730 = vpop.permute.xlu0 %729
  %731 = vrot.lane.b32.xlu0 %v623, 1
  %v732 = vpop.permute.xlu0 %731
  %733 = vrot.lane.b32.xlu0 %v624, 1
  %v734 = vpop.permute.xlu0 %733
  %v735 = vsel %vm275, %v732, %v734
  %v736 = vsel %vm275, %v730, %v732
  %v737 = vsel %vm275, %v728, %v730
  %v738 = vsel %vm275, %v734, %v728
  %v739 = vsel %vm284, %v738, 0.0
  %v740 = vsel %vm285, %v737, 0.0
  %v741 = vsel %vm286, %v736, 0.0
  %v742 = vsel %vm287, %v735, 0.0
  %743 = vrot.lane.b32.xlu0 %v621, 127
  %v744 = vpop.permute.xlu0 %743
  %745 = vrot.lane.b32.xlu0 %v622, 127
  %v746 = vpop.permute.xlu0 %745
  %747 = vrot.lane.b32.xlu0 %v623, 127
  %v748 = vpop.permute.xlu0 %747
  %749 = vrot.lane.b32.xlu0 %v624, 127
  %v750 = vpop.permute.xlu0 %749
  %v751 = vsel %vm300, %v748, %v750
  %v752 = vsel %vm300, %v746, %v748
  %v753 = vsel %vm300, %v744, %v746
  %v754 = vsel %vm300, %v750, %v744
  %v755 = vsel %vm309, %v753, 0.0
  %v756 = vsel %vm310, %v752, 0.0
  %v757 = vsel %vm311, %v751, 0.0
  %v758 = vsel %vm312, %v754, 0.0
  %759 = vrot.lane.b32.xlu0 %v621, 113
  %v760 = vpop.permute.xlu0 %759
  %761 = vrot.lane.b32.xlu0 %v622, 113
  %v762 = vpop.permute.xlu0 %761
  %763 = vrot.lane.b32.xlu0 %v623, 113
  %v764 = vpop.permute.xlu0 %763
  %765 = vrot.lane.b32.xlu0 %v624, 113
  %v766 = vpop.permute.xlu0 %765
  %v767 = vsel %vm325, %v764, %v766
  %v768 = vsel %vm325, %v762, %v764
  %v769 = vsel %vm325, %v760, %v762
  %v770 = vsel %vm325, %v766, %v760
  %v771 = vsel %vm334, %v769, 0.0
  %v772 = vsel %vm335, %v768, 0.0
  %v773 = vsel %vm336, %v767, 0.0
  %v774 = vsel %vm337, %v770, 0.0
  %775 = vrot.lane.b32.xlu0 %v621, 112
  %v776 = vpop.permute.xlu0 %775
  %777 = vrot.lane.b32.xlu0 %v622, 112
  %v778 = vpop.permute.xlu0 %777
  %779 = vrot.lane.b32.xlu0 %v623, 112
  %v780 = vpop.permute.xlu0 %779
  %781 = vrot.lane.b32.xlu0 %v624, 112
  %v782 = vpop.permute.xlu0 %781
  %v783 = vsel %vm350, %v780, %v782
  %v784 = vsel %vm350, %v778, %v780
  %v785 = vsel %vm350, %v776, %v778
  %v786 = vsel %vm350, %v782, %v776
  %v787 = vsel %vm359, %v785, 0.0
  %v788 = vsel %vm360, %v784, 0.0
  %v789 = vsel %vm361, %v783, 0.0
  %v790 = vsel %vm362, %v786, 0.0
  %791 = vrot.lane.b32.xlu0 %v621, 111
  %v792 = vpop.permute.xlu0 %791
  %793 = vrot.lane.b32.xlu0 %v622, 111
  %v794 = vpop.permute.xlu0 %793
  %795 = vrot.lane.b32.xlu0 %v623, 111
  %v796 = vpop.permute.xlu0 %795
  %797 = vrot.lane.b32.xlu0 %v624, 111
  %v798 = vpop.permute.xlu0 %797
  %v799 = vsel %vm375, %v796, %v798
  %v800 = vsel %vm375, %v794, %v796
  %v801 = vsel %vm375, %v792, %v794
  %v802 = vsel %vm375, %v798, %v792
  %v803 = vsel %vm384, %v801, 0.0
  %v804 = vsel %vm385, %v800, 0.0
  %v805 = vsel %vm386, %v799, 0.0
  %v806 = vsel %vm387, %v802, 0.0
  %v807 = vld [vmem:[%s4] sm:$0x3]
  %809 = vset.pattern.permute.xlu0 0
  %810 = vperm.xlu0 %809, %v807
  %v811 = vpop.permute.xlu0 %810
  %vm813 = vcmask 588800
  %v815 = vsel %vm813, %v678, 0
  %817 = vmatprep.subr.mxu0 %v692
  %818 = vmatpush1.msra.mxu0 %v691
  %819 = vmatprep.subr.mxu0 %v708
  %820 = vmatpush1.msra.mxu0 %v707
  %821 = vmatprep.subr.mxu0 %v724
  %822 = vmatpush1.msra.mxu0 %v723
  %823 = vmatprep.subr.mxu0 %v740
  %824 = vmatpush1.msra.mxu0 %v739
  %825 = vmatprep.subr.mxu0 %v622
  %826 = vmatpush1.msra.mxu0 %v621
  %827 = vmatprep.subr.mxu0 %v756
  %828 = vmatpush1.msra.mxu0 %v755
  %829 = vmatprep.subr.mxu0 %v772
  %830 = vmatpush1.msra.mxu0 %v771
  %831 = vmatprep.subr.mxu0 %v788
  %832 = vmatpush1.msra.mxu0 %v787
  %833 = vmatprep.subr.mxu0 %v804
  %834 = vmatpush1.msra.mxu0 %v803
  %835 = vmatprep.subr.mxu0 0.0
  %836 = vmatpush1.msra.mxu0 0.0
  %837 = vmatprep.subr.mxu0 0.0
  %838 = vmatpush1.msra.mxu0 0.0
  %839 = vmatprep.subr.mxu0 0.0
  %840 = vmatpush1.msra.mxu0 0.0
  %841 = vmatprep.subr.mxu0 0.0
  %842 = vmatpush1.msra.mxu0 0.0
  %843 = vmatprep.subr.mxu0 0.0
  %844 = vmatpush1.msra.mxu0 0.0
  %845 = vmatprep.subr.mxu0 0.0
  %846 = vmatpush1.msra.mxu0 0.0
  %847 = vmatprep.subr.mxu0 0.0
  %848 = vmatpush1.msra.mxu0 0.0
  %849 = vmatprep.subr.mxu0 0.0
  %850 = vmatpush1.msra.mxu0 0.0
  %851 = vmatprep.subr.mxu0 0.0
  %852 = vmatpush1.msra.mxu0 0.0
  %853 = vmatprep.subr.mxu0 0.0
  %854 = vmatpush1.msra.mxu0 0.0
  %855 = vmatprep.subr.mxu0 0.0
  %856 = vmatpush1.msra.mxu0 0.0
  %857 = vmatprep.subr.mxu0 0.0
  %858 = vmatpush1.msra.mxu0 0.0
  %859 = vmatprep.subr.mxu0 0.0
  %860 = vmatpush1.msra.mxu0 0.0
  %861 = vmatprep.subr.mxu0 0.0
  %862 = vmatpush1.msra.mxu0 0.0
  %863 = vmatprep.subr.mxu0 0.0
  %864 = vmatpush1.msra.mxu0 0.0
  %865 = vmatprep.subr.mxu0 0.0
  %866 = vmatpush1.msra.mxu0 0.0
  %867 = vmatprep.subr.mxu0 0.0
  %868 = vmatpush1.msra.mxu0 0.0
  %869 = vmatprep.subr.mxu0 0.0
  %870 = vmatpush1.msra.mxu0 0.0
  %871 = vmatprep.subr.mxu0 0.0
  %872 = vmatpush1.msra.mxu0 0.0
  %873 = vmatprep.subr.mxu0 0.0
  %874 = vmatpush1.msra.mxu0 0.0
  %875 = vmatprep.subr.mxu0 0.0
  %876 = vmatpush1.msra.mxu0 0.0
  %877 = vmatprep.subr.mxu0 0.0
  %878 = vmatpush1.msra.mxu0 0.0
  %879 = vmatprep.subr.mxu0 0.0
  %880 = vmatpush1.msra.mxu0 0.0
  %881 = vmatprep.mubr.f32.mxu0 0.0
  %882 = vmatmul.mubr.f32.gmra.mrb[0].mxu0 %v815
  %v883 = vpop.f32.mrb[0].mxu0
  %v884 = vadd.f32 %v811, %v883
  %v885 = vpop.f32.mrb[0].mxu0
  %v886 = vadd.f32 %v811, %v885
  %887 = vdwg.mxu0
  %888 = vmatprep.subr.mxu0 %v694
  %889 = vmatpush1.msra.mxu0 %v693
  %890 = vmatprep.subr.mxu0 %v710
  %891 = vmatpush1.msra.mxu0 %v709
  %892 = vmatprep.subr.mxu0 %v726
  %893 = vmatpush1.msra.mxu0 %v725
  %894 = vmatprep.subr.mxu0 %v742
  %895 = vmatpush1.msra.mxu0 %v741
  %896 = vmatprep.subr.mxu0 %v624
  %897 = vmatpush1.msra.mxu0 %v623
  %898 = vmatprep.subr.mxu0 %v758
  %899 = vmatpush1.msra.mxu0 %v757
  %900 = vmatprep.subr.mxu0 %v774
  %901 = vmatpush1.msra.mxu0 %v773
  %902 = vmatprep.subr.mxu0 %v790
  %903 = vmatpush1.msra.mxu0 %v789
  %904 = vmatprep.subr.mxu0 %v806
  %905 = vmatpush1.msra.mxu0 %v805
  %906 = vmatprep.subr.mxu0 0.0
  %907 = vmatpush1.msra.mxu0 0.0
  %908 = vmatprep.subr.mxu0 0.0
  %909 = vmatpush1.msra.mxu0 0.0
  %910 = vmatprep.subr.mxu0 0.0
  %911 = vmatpush1.msra.mxu0 0.0
  %912 = vmatprep.subr.mxu0 0.0
  %913 = vmatpush1.msra.mxu0 0.0
  %914 = vmatprep.subr.mxu0 0.0
  %915 = vmatpush1.msra.mxu0 0.0
  %916 = vmatprep.subr.mxu0 0.0
  %917 = vmatpush1.msra.mxu0 0.0
  %918 = vmatprep.subr.mxu0 0.0
  %919 = vmatpush1.msra.mxu0 0.0
  %920 = vmatprep.subr.mxu0 0.0
  %921 = vmatpush1.msra.mxu0 0.0
  %922 = vmatprep.subr.mxu0 0.0
  %923 = vmatpush1.msra.mxu0 0.0
  %924 = vmatprep.subr.mxu0 0.0
  %925 = vmatpush1.msra.mxu0 0.0
  %926 = vmatprep.subr.mxu0 0.0
  %927 = vmatpush1.msra.mxu0 0.0
  %928 = vmatprep.subr.mxu0 0.0
  %929 = vmatpush1.msra.mxu0 0.0
  %930 = vmatprep.subr.mxu0 0.0
  %931 = vmatpush1.msra.mxu0 0.0
  %932 = vmatprep.subr.mxu0 0.0
  %933 = vmatpush1.msra.mxu0 0.0
  %934 = vmatprep.subr.mxu0 0.0
  %935 = vmatpush1.msra.mxu0 0.0
  %936 = vmatprep.subr.mxu0 0.0
  %937 = vmatpush1.msra.mxu0 0.0
  %938 = vmatprep.subr.mxu0 0.0
  %939 = vmatpush1.msra.mxu0 0.0
  %940 = vmatprep.subr.mxu0 0.0
  %941 = vmatpush1.msra.mxu0 0.0
  %942 = vmatprep.subr.mxu0 0.0
  %943 = vmatpush1.msra.mxu0 0.0
  %944 = vmatprep.subr.mxu0 0.0
  %945 = vmatpush1.msra.mxu0 0.0
  %946 = vmatprep.subr.mxu0 0.0
  %947 = vmatpush1.msra.mxu0 0.0
  %948 = vmatprep.subr.mxu0 0.0
  %949 = vmatpush1.msra.mxu0 0.0
  %950 = vmatprep.subr.mxu0 0.0
  %951 = vmatpush1.msra.mxu0 0.0
  %952 = vmatprep.mubr.f32.mxu0 0.0
  %953 = vmatmul.mubr.f32.gmra.mrb[0].mxu0 %v815
  %v954 = vpop.f32.mrb[0].mxu0
  %v955 = vadd.f32 %v811, %v954
  %v956 = vpop.f32.mrb[0].mxu0
  %v957 = vadd.f32 %v811, %v956
  %958 = vdwg.mxu0
  %v959 = vmax.f32 %v884, 0.0
  %v960 = vmax.f32 %v886, 0.0
  %v961 = vmax.f32 %v955, 0.0
  %v962 = vmax.f32 %v957, 0.0
  %v967 = vrot.slane %v959, 7
  %v968 = vrot.slane %v960, 7
  %v969 = vrot.slane %v961, 7
  %v970 = vrot.slane %v962, 7
  %v975 = vrot.slane %v959, 6
  %v976 = vrot.slane %v960, 6
  %v977 = vrot.slane %v961, 6
  %v978 = vrot.slane %v962, 6
  %v983 = vsel %vm653, %v959, %v967
  %v984 = vsel %vm653, %v960, %v968
  %v985 = vsel %vm653, %v961, %v969
  %v986 = vsel %vm653, %v962, %v970
  %v987 = vsel %vm658, %v983, %v967
  %v988 = vsel %vm658, %v984, %v968
  %v989 = vsel %vm658, %v985, %v969
  %v990 = vsel %vm658, %v986, %v970
  %v991 = vsel %vm663, %v987, %v975
  %v992 = vsel %vm663, %v988, %v976
  %v993 = vsel %vm663, %v989, %v977
  %v994 = vsel %vm663, %v990, %v978
  %v999 = vcombine.low %v991, %v992
  %v1000 = vcombine.low %v993, %v994
  %1003 = vst [vmem:[%s8] sm:$0xff] %v999
  %1004 = vst [vmem:[%s8 + $0x8] sm:$0xff] %v1000
  %v1005 = vrot.slane %v959, 4
  %v1006 = vrot.slane %v960, 4
  %v1007 = vrot.slane %v961, 4
  %v1008 = vrot.slane %v962, 4
  %v1013 = vsel %vm658, %v959, %v975
  %v1014 = vsel %vm658, %v960, %v976
  %v1015 = vsel %vm658, %v961, %v977
  %v1016 = vsel %vm658, %v962, %v978
  %v1017 = vsel %vm440, %v1013, %v1005
  %v1018 = vsel %vm440, %v1014, %v1006
  %v1019 = vsel %vm440, %v1015, %v1007
  %v1020 = vsel %vm440, %v1016, %v1008
  %v1021 = vld [vmem:[%s5] sm:$0x3f]
  %v1022 = vld [vmem:[%s5 + $0x8] sm:$0x3f]
  %v1023 = vld [vmem:[%s5 + $0x10] sm:$0x3f]
  %v1024 = vld [vmem:[%s5 + $0x18] sm:$0x3f]
  %v1025 = vsub.f32 %v1017, %v1021
  %v1026 = vsub.f32 %v1018, %v1022
  %v1027 = vsub.f32 %v1019, %v1023
  %v1028 = vsub.f32 %v1020, %v1024
  %v1029 = vmul.f32 %v1025, 25.0
  %v1030 = vmul.f32 %v1026, 25.0
  %v1031 = vmul.f32 %v1027, 25.0
  %v1032 = vmul.f32 %v1028, 25.0
  %v1033 = vsub.f32 0.0, %v1029
  %v1034 = vsub.f32 0.0, %v1030
  %v1035 = vsub.f32 0.0, %v1031
  %v1036 = vsub.f32 0.0, %v1032
  %v1037 = vmul.f32 %v1033, 1.442695
  %v1038 = vpow.pop %v1037
  %v1039 = vmul.f32 %v1034, 1.442695
  %v1040 = vpow.pop %v1039
  %v1041 = vmul.f32 %v1035, 1.442695
  %v1042 = vpow.pop %v1041
  %v1043 = vmul.f32 %v1036, 1.442695
  %v1044 = vpow.pop %v1043
  %v1045 = vadd.f32 %v1038, 1.0
  %v1046 = vadd.f32 %v1040, 1.0
  %v1047 = vadd.f32 %v1042, 1.0
  %v1048 = vadd.f32 %v1044, 1.0
  %v1049 = vrcp.pop %v1045
  %v1050 = vrcp.pop %v1046
  %v1051 = vrcp.pop %v1047
  %v1052 = vrcp.pop %v1048
  %1053 = vst [vmem:[%s6] sm:$0x3f] %v1049
  %1054 = vst [vmem:[%s6 + $0x8] sm:$0x3f] %v1050
  %1055 = vst [vmem:[%s6 + $0x10] sm:$0x3f] %v1051
  %1056 = vst [vmem:[%s6 + $0x18] sm:$0x3f] %v1052
  // Predicated region
  $region26: #{conv_stal_forward.1} parent=0 // pred_check
    _
  $region27: #{conv_stal_forward.1} parent=0 // pred_check_branch
    %1058 = sbr.rel (0) target = $region29
  $region28: #{conv_stal_forward.1} parent=0 // pred_region
    _
  $region29: #{conv_stal_forward.1} parent=0 // pred_fallthru
    _
  // Predicated region
  $region30: #{conv_stal_forward.1} parent=0 // pred_check
    _
  $region31: #{conv_stal_forward.1} parent=0 // pred_check_branch
    %1060 = sbr.rel (0) target = $region33
  $region32: #{conv_stal_forward.1} parent=0 // pred_region
    _
  $region33: #{conv_stal_forward.1} parent=0 // pred_fallthru
    _
  // Predicated region
  $region34: #{conv_stal_forward.1} parent=0 // pred_check
    _
  $region35: #{conv_stal_forward.1} parent=0 // pred_check_branch
    %1062 = sbr.rel (0) target = $region37
  $region36: #{conv_stal_forward.1} parent=0 // pred_region
    _
  $region37: #{conv_stal_forward.1} parent=0 // pred_fallthru
    _
  // Predicated region
  $region38: #{conv_stal_forward.1} parent=0 // pred_check
    _
  $region39: #{conv_stal_forward.1} parent=0 // pred_check_branch
    %1064 = sbr.rel (0) target = $region41
  $region40: #{conv_stal_forward.1} parent=0 // pred_region
    _
  $region41: #{conv_stal_forward.1} parent=0 // pred_fallthru
    _
  // Predicated region
  $region42: #{conv_stal_forward.1} parent=0 // pred_check
    _
  $region43: #{conv_stal_forward.1} parent=0 // pred_check_branch
    %1066 = sbr.rel (0) target = $region45
  $region44: #{conv_stal_forward.1} parent=0 // pred_region
    _
  $region45: #{conv_stal_forward.1} parent=0 // pred_fallthru
    _
  // Predicated region
  $region46: #{conv_stal_forward.1} parent=0 // pred_check
    _
  $region47: #{conv_stal_forward.1} parent=0 // pred_check_branch
    %1068 = sbr.rel (0) target = $region49
  $region48: #{conv_stal_forward.1} parent=0 // pred_region
    _
  $region49: #{conv_stal_forward.1} parent=0 // pred_fallthru
    _

</llo_original>
